<compile_context>
chip_gen: v7x
topology: tpu7x:2x2x1
jax: 0.10.0
libtpu: 0.0.40
codegen_flags: <defaults>
</compile_context>

<pallas_src>
import jax
import jax.numpy as jnp
import numpy as np
from jax.experimental import pallas as pl
from jax.experimental.pallas import tpu as pltpu


def _glm_loglik_kernel(x_ref, beta_ref, bias_ref, counts_ref, ntot_ref, out_ref):
    """One (gene-block, spot-tile) step.

    x_ref:      (St, F)              shared design matrix tile
    beta_ref:   (1, F, (K-1)*Gb)     packed: col = i*Gb + g_local
    bias_ref:   (1, 1, (K-1)*Gb)
    counts_ref: (1, St, (K-1)*Gb)    packed counts of the first K-1 isoforms (native dtype)
    ntot_ref:   (1, St, Gb)          per-spot total counts (all K isoforms)
    out_ref:    (1, 1, Gb)           f32, accumulated across spot tiles
    """
    Gb = out_ref.shape[-1]
    KGb = beta_ref.shape[-1]
    k_m1 = KGb // Gb
    St = x_ref.shape[0]

    @pl.when(pl.program_id(1) == 0)
    def _():
        out_ref[...] = jnp.zeros_like(out_ref)

    x = x_ref[...]                                    # (St, F)   f32
    beta = beta_ref[0]                                # (F, (K-1)*Gb)
    bias = bias_ref[0]                                # (1, (K-1)*Gb)
    counts = counts_ref[0].astype(jnp.float32)        # (St, (K-1)*Gb)
    n_tot = ntot_ref[0].astype(jnp.float32)           # (St, Gb)

    # Linear predictor for the whole gene block in one MXU matmul.
    eta = jnp.dot(x, beta, preferred_element_type=jnp.float32) + bias   # (St, (K-1)*Gb)

    # log-softmax over [eta_0..eta_{K-2}, 0] per gene.  Isoform planes are contiguous
    # Gb-wide lane slabs, so the per-gene max / sum-exp / cross terms are planewise
    # elementwise ops over (St, Gb) — full 128-lane vregs, no XLU.
    m = jnp.zeros((St, Gb), jnp.float32)              # implicit zero reference column
    for i in range(k_m1):
        m = jnp.maximum(m, eta[:, i * Gb:(i + 1) * Gb])
    sumexp = jnp.exp(-m)                              # zero-column contribution
    cross = jnp.zeros((St, Gb), jnp.float32)
    for i in range(k_m1):
        e = eta[:, i * Gb:(i + 1) * Gb]
        sumexp = sumexp + jnp.exp(e - m)
        cross = cross + counts[:, i * Gb:(i + 1) * Gb] * e
    lse = m + jnp.log(sumexp)                         # (St, Gb)
    per_spot = cross - n_tot * lse                    # (St, Gb)

    # Spot reduction on the MXU: (1, St) @ (St, Gb) -> (1, Gb), already lane-dense.
    ones_row = jnp.ones((1, St), jnp.float32)
    partial = jnp.dot(ones_row, per_spot, preferred_element_type=jnp.float32)
    out_ref[...] += partial.reshape(1, 1, Gb)


def pack_data(counts, X_spot, gene_block=128, spot_block=256):
    """One-time, parameter-independent data preparation (cache and reuse across forwards)."""
    n_genes, n_spots, n_isos = counts.shape
    n_factors = X_spot.shape[-1]
    k_m1 = n_isos - 1
    spot_block = max(8, (spot_block // 8) * 8)

    nb = -(-n_genes // gene_block)
    ns = -(-n_spots // spot_block)
    Gp = nb * gene_block
    Sp = ns * spot_block

    # counts stay in their native dtype; padded genes/spots contribute exactly 0 log-lik.
    c = jnp.pad(counts, ((0, Gp - n_genes), (0, Sp - n_spots), (0, 0)))
    # counts_p[b, s, i*Gb + g] = counts[b*Gb + g, s, i]   (first K-1 isoforms only)
    counts_p = (c[..., :k_m1]
                .reshape(nb, gene_block, Sp, k_m1)
                .transpose(0, 2, 3, 1)
                .reshape(nb, Sp, k_m1 * gene_block))
    # per-spot total counts over all K isoforms
    ntot_p = c.sum(-1).reshape(nb, gene_block, Sp).transpose(0, 2, 1)   # (nb, Sp, Gb)

    x = jnp.pad(X_spot.reshape(n_spots, n_factors).astype(jnp.float32),
                ((0, Sp - n_spots), (0, 0)))

    # TODO(synk): lgamma has no Mosaic lowering; the parameter-independent multinomial
    # coefficient is computed once here in plain JAX and cached (not re-run per forward).
    cf = counts.astype(jnp.float32)
    const = (jax.scipy.special.gammaln(cf.sum(-1) + 1.0).sum(-1)
             - jax.scipy.special.gammaln(cf + 1.0).sum((-1, -2)))

    return dict(counts=counts_p, ntot=ntot_p, x=x, const=const,
                n_genes=n_genes, n_isos=n_isos, n_factors=n_factors,
                gene_block=gene_block, spot_block=spot_block,
                n_blocks=nb, n_spot_tiles=ns)


def _pack_params(beta, bias_eta, gene_block):
    """Repack (G,F,K-1)/(G,K-1) params into lane-dense per-isoform blocks."""
    G, F, k_m1 = beta.shape
    nb = -(-G // gene_block)
    Gp = nb * gene_block
    beta = jnp.pad(beta.astype(jnp.float32), ((0, Gp - G), (0, 0), (0, 0)))
    bias = jnp.pad(bias_eta.astype(jnp.float32), ((0, Gp - G), (0, 0)))
    # beta_p[b, f, i*Gb + g] = beta[b*Gb + g, f, i]
    beta_p = (beta.reshape(nb, gene_block, F, k_m1)
              .transpose(0, 2, 3, 1)
              .reshape(nb, F, k_m1 * gene_block))
    bias_p = (bias.reshape(nb, gene_block, k_m1)
              .transpose(0, 2, 1)
              .reshape(nb, 1, k_m1 * gene_block))
    return beta_p, bias_p


def multinom_glm_forward(packed, beta, bias_eta):
    """Pallas equivalent of MultinomGLM.forward(). Returns (n_genes,) log-likelihood."""
    Gb = packed['gene_block']
    St = packed['spot_block']
    nb = packed['n_blocks']
    ns = packed['n_spot_tiles']
    k_m1 = packed['n_isos'] - 1
    KGb = k_m1 * Gb
    F = packed['n_factors']

    beta_p, bias_p = _pack_params(beta, bias_eta, Gb)

    out = pl.pallas_call(
        _glm_loglik_kernel,
        out_shape=jax.ShapeDtypeStruct((nb, 1, Gb), jnp.float32),
        grid_spec=pltpu.PrefetchScalarGridSpec(
            num_scalar_prefetch=0,
            grid=(nb, ns),
            in_specs=[
                pl.BlockSpec((St, F), lambda b, s: (s, 0)),          # X (shared)
                pl.BlockSpec((1, F, KGb), lambda b, s: (b, 0, 0)),   # packed beta
                pl.BlockSpec((1, 1, KGb), lambda b, s: (b, 0, 0)),   # packed bias
                pl.BlockSpec((1, St, KGb), lambda b, s: (b, s, 0)),  # packed counts
                pl.BlockSpec((1, St, Gb), lambda b, s: (b, s, 0)),   # per-spot totals
            ],
            out_specs=pl.BlockSpec((1, 1, Gb), lambda b, s: (b, 0, 0)),
        ),
        compiler_params=pltpu.CompilerParams(
            dimension_semantics=("parallel", "arbitrary")),
    )(packed['x'], beta_p, bias_p, packed['counts'], packed['ntot'])

    param_term = out.reshape(nb * Gb)[:packed['n_genes']]
    return param_term + packed['const']


def forward_reference(counts, X_spot, beta, bias_eta):
    """Pure-JAX reference of MultinomGLM.forward()."""
    counts = counts.astype(jnp.float32)
    n_genes, n_spots, _ = counts.shape
    x2 = X_spot.reshape(n_spots, -1).astype(jnp.float32)
    eta = jnp.einsum('sf,gfk->gsk', x2, beta.astype(jnp.float32)) + bias_eta[:, None, :]
    logits = jnp.concatenate([eta, jnp.zeros((n_genes, n_spots, 1), jnp.float32)], axis=-1)
    log_alpha = jax.nn.log_softmax(logits, axis=-1)
    ll = (counts * log_alpha).sum((-1, -2))
    ll += (jax.scipy.special.gammaln(counts.sum(-1) + 1.0).sum(-1)
           - jax.scipy.special.gammaln(counts + 1.0).sum((-1, -2)))
    return ll


if __name__ == "__main__":
    key = jax.random.PRNGKey(0)
    # Non-multiple shapes exercise the gene/spot padding and the multi-tile accumulation.
    n_genes, n_spots, n_isos, n_factors = 200, 150, 8, 4
    k1, k2, k3, k4 = jax.random.split(key, 4)

    counts = jax.random.randint(k1, (n_genes, n_spots, n_isos), 0, 20)          # int32
    X_spot = jax.random.normal(k2, (1, n_spots, n_factors), dtype=jnp.float32)
    beta = 0.1 * jax.random.normal(k3, (n_genes, n_factors, n_isos - 1), dtype=jnp.float32)
    bias_eta = 0.1 * jax.random.normal(k4, (n_genes, n_isos - 1), dtype=jnp.float32)

    # One-time data packing + lgamma constant (cached across fitting iterations).
    packed = pack_data(counts, X_spot, gene_block=128, spot_block=64)

    out = multinom_glm_forward(packed, beta, bias_eta)
    out = jax.block_until_ready(out)

    ref = forward_reference(counts, X_spot, beta, bias_eta)
    np.testing.assert_allclose(np.asarray(out), np.asarray(ref), rtol=1e-3, atol=1e-1)
    print("KERNEL_OK")
</pallas_src>

<mosaic_0001>
module attributes {stable_mosaic.version = 11 : i64} {
  func.func @_glm_loglik_kernel(%arg0: i32, %arg1: i32, %arg2: memref<64x4xf32, #tpu.memory_space<vmem>>, %arg3: memref<1x4x896xf32, #tpu.memory_space<vmem>>, %arg4: memref<1x1x896xf32, #tpu.memory_space<vmem>>, %arg5: memref<1x64x896xi32, #tpu.memory_space<vmem>>, %arg6: memref<1x64x128xi32, #tpu.memory_space<vmem>>, %arg7: memref<1x1x128xf32, #tpu.memory_space<vmem>>) attributes {dimension_semantics = [#tpu.dimension_semantics<parallel>, #tpu.dimension_semantics<arbitrary>], iteration_bounds = array<i64: 2, 3>, scalar_prefetch = 0 : i64, scratch_operands = 0 : i64, tpu.core_type = #tpu.core_type<tc>, window_params = [{transform_indices = @transform_0, window_bounds = array<i64: 64, 4>}, {transform_indices = @transform_1, window_bounds = array<i64: 1, 4, 896>}, {transform_indices = @transform_2, window_bounds = array<i64: 1, 1, 896>}, {transform_indices = @transform_3, window_bounds = array<i64: 1, 64, 896>}, {transform_indices = @transform_4, window_bounds = array<i64: 1, 64, 128>}, {transform_indices = @transform_5, window_bounds = array<i64: 1, 1, 128>}]} {
    %c0_i32 = arith.constant 0 : i32
    %0 = arith.cmpi eq, %arg1, %c0_i32 : i32
    %1 = arith.extui %0 : i1 to i32
    %c0_i32_0 = arith.constant 0 : i32
    %2 = arith.cmpi ne, %1, %c0_i32_0 : i32
    scf.if %2 {
      %cst_25 = arith.constant 0.000000e+00 : f32
      %95 = vector.broadcast %cst_25 : f32 to vector<1x1x128xf32>
      %c0_26 = arith.constant 0 : index
      %c0_27 = arith.constant 0 : index
      %c0_28 = arith.constant 0 : index
      %96 = vector.load %arg7[%c0_26, %c0_27, %c0_28] : memref<1x1x128xf32, #tpu.memory_space<vmem>>, vector<1x1x128xf32>
      tpu.vector_store %arg7[%c0_26, %c0_27, %c0_28], %95 {strides = array<i32>} : memref<1x1x128xf32, #tpu.memory_space<vmem>>, vector<1x1x128xf32>,
    } else {
    }
    %c0 = arith.constant 0 : index
    %c0_1 = arith.constant 0 : index
    %3 = vector.load %arg2[%c0, %c0_1] : memref<64x4xf32, #tpu.memory_space<vmem>>, vector<64x4xf32>
    %c0_2 = arith.constant 0 : index
    %c0_3 = arith.constant 0 : index
    %c0_4 = arith.constant 0 : index
    %4 = vector.load %arg3[%c0_2, %c0_3, %c0_4] : memref<1x4x896xf32, #tpu.memory_space<vmem>>, vector<1x4x896xf32>
    %5 = vector.shape_cast %4 : vector<1x4x896xf32> to vector<4x896xf32>
    %c0_5 = arith.constant 0 : index
    %c0_6 = arith.constant 0 : index
    %c0_7 = arith.constant 0 : index
    %6 = vector.load %arg4[%c0_5, %c0_6, %c0_7] : memref<1x1x896xf32, #tpu.memory_space<vmem>>, vector<1x1x896xf32>
    %7 = vector.shape_cast %6 : vector<1x1x896xf32> to vector<1x896xf32>
    %c0_8 = arith.constant 0 : index
    %c0_9 = arith.constant 0 : index
    %c0_10 = arith.constant 0 : index
    %8 = vector.load %arg5[%c0_8, %c0_9, %c0_10] : memref<1x64x896xi32, #tpu.memory_space<vmem>>, vector<1x64x896xi32>
    %9 = vector.shape_cast %8 : vector<1x64x896xi32> to vector<64x896xi32>
    %10 = arith.sitofp %9 : vector<64x896xi32> to vector<64x896xf32>
    %c0_11 = arith.constant 0 : index
    %c0_12 = arith.constant 0 : index
    %c0_13 = arith.constant 0 : index
    %11 = vector.load %arg6[%c0_11, %c0_12, %c0_13] : memref<1x64x128xi32, #tpu.memory_space<vmem>>, vector<1x64x128xi32>
    %12 = vector.shape_cast %11 : vector<1x64x128xi32> to vector<64x128xi32>
    %13 = arith.sitofp %12 : vector<64x128xi32> to vector<64x128xf32>
    %cst = arith.constant dense<0.000000e+00> : vector<64x896xf32>
    %14 = tpu.matmul %3, %5, %cst {dimension_numbers = #tpu.dot_dimension_numbers<[1], [0], [0], [1], [0, 0, 1, 1], [], []>} : vector<64x4xf32>, vector<4x896xf32>, vector<64x896xf32> -> vector<64x896xf32>
    %15 = vector.broadcast %7 : vector<1x896xf32> to vector<64x896xf32>
    %16 = arith.addf %14, %15 : vector<64x896xf32>
    %cst_14 = arith.constant 0.000000e+00 : f32
    %17 = vector.broadcast %cst_14 : f32 to vector<64x128xf32>
    %18 = vector.extract_strided_slice %16 {offsets = [0, 0], sizes = [64, 128], strides = [1, 1]} : vector<64x896xf32> to vector<64x128xf32>
    %19 = arith.maximumf %17, %18 : vector<64x128xf32>
    %20 = vector.extract_strided_slice %16 {offsets = [0, 128], sizes = [64, 128], strides = [1, 1]} : vector<64x896xf32> to vector<64x128xf32>
    %21 = arith.maximumf %19, %20 : vector<64x128xf32>
    %22 = vector.extract_strided_slice %16 {offsets = [0, 256], sizes = [64, 128], strides = [1, 1]} : vector<64x896xf32> to vector<64x128xf32>
    %23 = arith.maximumf %21, %22 : vector<64x128xf32>
    %24 = vector.extract_strided_slice %16 {offsets = [0, 384], sizes = [64, 128], strides = [1, 1]} : vector<64x896xf32> to vector<64x128xf32>
    %25 = arith.maximumf %23, %24 : vector<64x128xf32>
    %26 = vector.extract_strided_slice %16 {offsets = [0, 512], sizes = [64, 128], strides = [1, 1]} : vector<64x896xf32> to vector<64x128xf32>
    %27 = arith.maximumf %25, %26 : vector<64x128xf32>
    %28 = vector.extract_strided_slice %16 {offsets = [0, 640], sizes = [64, 128], strides = [1, 1]} : vector<64x896xf32> to vector<64x128xf32>
    %29 = arith.maximumf %27, %28 : vector<64x128xf32>
    %30 = vector.extract_strided_slice %16 {offsets = [0, 768], sizes = [64, 128], strides = [1, 1]} : vector<64x896xf32> to vector<64x128xf32>
    %31 = arith.maximumf %29, %30 : vector<64x128xf32>
    %cst_15 = arith.constant 0.000000e+00 : f32
    %32 = vector.broadcast %cst_15 : f32 to vector<64x128xf32>
    %33 = arith.subf %32, %31 : vector<64x128xf32>
    %34 = math.exp %33 : vector<64x128xf32>
    %cst_16 = arith.constant 0.000000e+00 : f32
    %35 = vector.broadcast %cst_16 : f32 to vector<64x128xf32>
    %36 = vector.extract_strided_slice %16 {offsets = [0, 0], sizes = [64, 128], strides = [1, 1]} : vector<64x896xf32> to vector<64x128xf32>
    %37 = arith.subf %36, %31 : vector<64x128xf32>
    %38 = math.exp %37 : vector<64x128xf32>
    %39 = arith.addf %34, %38 : vector<64x128xf32>
    %40 = vector.extract_strided_slice %10 {offsets = [0, 0], sizes = [64, 128], strides = [1, 1]} : vector<64x896xf32> to vector<64x128xf32>
    %41 = arith.mulf %40, %36 : vector<64x128xf32>
    %42 = arith.addf %35, %41 : vector<64x128xf32>
    %43 = vector.extract_strided_slice %16 {offsets = [0, 128], sizes = [64, 128], strides = [1, 1]} : vector<64x896xf32> to vector<64x128xf32>
    %44 = arith.subf %43, %31 : vector<64x128xf32>
    %45 = math.exp %44 : vector<64x128xf32>
    %46 = arith.addf %39, %45 : vector<64x128xf32>
    %47 = vector.extract_strided_slice %10 {offsets = [0, 128], sizes = [64, 128], strides = [1, 1]} : vector<64x896xf32> to vector<64x128xf32>
    %48 = arith.mulf %47, %43 : vector<64x128xf32>
    %49 = arith.addf %42, %48 : vector<64x128xf32>
    %50 = vector.extract_strided_slice %16 {offsets = [0, 256], sizes = [64, 128], strides = [1, 1]} : vector<64x896xf32> to vector<64x128xf32>
    %51 = arith.subf %50, %31 : vector<64x128xf32>
    %52 = math.exp %51 : vector<64x128xf32>
    %53 = arith.addf %46, %52 : vector<64x128xf32>
    %54 = vector.extract_strided_slice %10 {offsets = [0, 256], sizes = [64, 128], strides = [1, 1]} : vector<64x896xf32> to vector<64x128xf32>
    %55 = arith.mulf %54, %50 : vector<64x128xf32>
    %56 = arith.addf %49, %55 : vector<64x128xf32>
    %57 = vector.extract_strided_slice %16 {offsets = [0, 384], sizes = [64, 128], strides = [1, 1]} : vector<64x896xf32> to vector<64x128xf32>
    %58 = arith.subf %57, %31 : vector<64x128xf32>
    %59 = math.exp %58 : vector<64x128xf32>
    %60 = arith.addf %53, %59 : vector<64x128xf32>
    %61 = vector.extract_strided_slice %10 {offsets = [0, 384], sizes = [64, 128], strides = [1, 1]} : vector<64x896xf32> to vector<64x128xf32>
    %62 = arith.mulf %61, %57 : vector<64x128xf32>
    %63 = arith.addf %56, %62 : vector<64x128xf32>
    %64 = vector.extract_strided_slice %16 {offsets = [0, 512], sizes = [64, 128], strides = [1, 1]} : vector<64x896xf32> to vector<64x128xf32>
    %65 = arith.subf %64, %31 : vector<64x128xf32>
    %66 = math.exp %65 : vector<64x128xf32>
    %67 = arith.addf %60, %66 : vector<64x128xf32>
    %68 = vector.extract_strided_slice %10 {offsets = [0, 512], sizes = [64, 128], strides = [1, 1]} : vector<64x896xf32> to vector<64x128xf32>
    %69 = arith.mulf %68, %64 : vector<64x128xf32>
    %70 = arith.addf %63, %69 : vector<64x128xf32>
    %71 = vector.extract_strided_slice %16 {offsets = [0, 640], sizes = [64, 128], strides = [1, 1]} : vector<64x896xf32> to vector<64x128xf32>
    %72 = arith.subf %71, %31 : vector<64x128xf32>
    %73 = math.exp %72 : vector<64x128xf32>
    %74 = arith.addf %67, %73 : vector<64x128xf32>
    %75 = vector.extract_strided_slice %10 {offsets = [0, 640], sizes = [64, 128], strides = [1, 1]} : vector<64x896xf32> to vector<64x128xf32>
    %76 = arith.mulf %75, %71 : vector<64x128xf32>
    %77 = arith.addf %70, %76 : vector<64x128xf32>
    %78 = vector.extract_strided_slice %16 {offsets = [0, 768], sizes = [64, 128], strides = [1, 1]} : vector<64x896xf32> to vector<64x128xf32>
    %79 = arith.subf %78, %31 : vector<64x128xf32>
    %80 = math.exp %79 : vector<64x128xf32>
    %81 = arith.addf %74, %80 : vector<64x128xf32>
    %82 = vector.extract_strided_slice %10 {offsets = [0, 768], sizes = [64, 128], strides = [1, 1]} : vector<64x896xf32> to vector<64x128xf32>
    %83 = arith.mulf %82, %78 : vector<64x128xf32>
    %84 = arith.addf %77, %83 : vector<64x128xf32>
    %85 = math.log %81 : vector<64x128xf32>
    %86 = arith.addf %31, %85 : vector<64x128xf32>
    %87 = arith.mulf %13, %86 : vector<64x128xf32>
    %88 = arith.subf %84, %87 : vector<64x128xf32>
    %cst_17 = arith.constant 1.000000e+00 : f32
    %89 = vector.broadcast %cst_17 : f32 to vector<1x64xf32>
    %cst_18 = arith.constant dense<0.000000e+00> : vector<1x128xf32>
    %90 = tpu.matmul %89, %88, %cst_18 {dimension_numbers = #tpu.dot_dimension_numbers<[1], [0], [0], [1], [0, 0, 1, 1], [], []>} : vector<1x64xf32>, vector<64x128xf32>, vector<1x128xf32> -> vector<1x128xf32>
    %c0_19 = arith.constant 0 : index
    %c0_20 = arith.constant 0 : index
    %c0_21 = arith.constant 0 : index
    %91 = vector.load %arg7[%c0_19, %c0_20, %c0_21] : memref<1x1x128xf32, #tpu.memory_space<vmem>>, vector<1x1x128xf32>
    %92 = vector.shape_cast %90 : vector<1x128xf32> to vector<1x1x128xf32>
    %93 = arith.addf %91, %92 : vector<1x1x128xf32>
    %c0_22 = arith.constant 0 : index
    %c0_23 = arith.constant 0 : index
    %c0_24 = arith.constant 0 : index
    %94 = vector.load %arg7[%c0_22, %c0_23, %c0_24] : memref<1x1x128xf32, #tpu.memory_space<vmem>>, vector<1x1x128xf32>
    tpu.vector_store %arg7[%c0_22, %c0_23, %c0_24], %93 {strides = array<i32>} : memref<1x1x128xf32, #tpu.memory_space<vmem>>, vector<1x1x128xf32>,
    return
  }
  func.func @transform_0(%arg0: i32, %arg1: i32) -> (i32, i32) {
    %c0_i32 = arith.constant 0 : i32
    %c0_i32_0 = arith.constant 0 : i32
    return %arg1, %c0_i32 : i32, i32
  }
  func.func @transform_1(%arg0: i32, %arg1: i32) -> (i32, i32, i32) {
    %c0_i32 = arith.constant 0 : i32
    %c0_i32_0 = arith.constant 0 : i32
    %c0_i32_1 = arith.constant 0 : i32
    return %arg0, %c0_i32, %c0_i32_0 : i32, i32, i32
  }
  func.func @transform_2(%arg0: i32, %arg1: i32) -> (i32, i32, i32) {
    %c0_i32 = arith.constant 0 : i32
    %c0_i32_0 = arith.constant 0 : i32
    %c0_i32_1 = arith.constant 0 : i32
    return %arg0, %c0_i32, %c0_i32_0 : i32, i32, i32
  }
  func.func @transform_3(%arg0: i32, %arg1: i32) -> (i32, i32, i32) {
    %c0_i32 = arith.constant 0 : i32
    %c0_i32_0 = arith.constant 0 : i32
    return %arg0, %arg1, %c0_i32 : i32, i32, i32
  }
  func.func @transform_4(%arg0: i32, %arg1: i32) -> (i32, i32, i32) {
    %c0_i32 = arith.constant 0 : i32
    %c0_i32_0 = arith.constant 0 : i32
    return %arg0, %arg1, %c0_i32 : i32, i32, i32
  }
  func.func @transform_5(%arg0: i32, %arg1: i32) -> (i32, i32, i32) {
    %c0_i32 = arith.constant 0 : i32
    %c0_i32_0 = arith.constant 0 : i32
    %c0_i32_1 = arith.constant 0 : i32
    return %arg0, %c0_i32, %c0_i32_0 : i32, i32, i32
  }
}

</mosaic_0001>

<llo_original>
// kernel: tpu_custom_call.1
$region0: #{tpu_custom_call.1}
  #allocation0 [shape = 'u32[]', space=smem, size = 0x4, offset = 0x4, fixed_abs, tag = 'smem constant byte address 0x4 - core index']
  #allocation1 [shape = 'u32[144,128]{1,0:T(1,128)}', space=vmem, size = 0x12000, scoped, tag = 'internal scratch']
  %s0 = inlined_call_operand.vmem [shape: f32[192,4], index: 0, kind: input, shape index: {}]
  %s1 = inlined_call_operand.hbm [shape: f32[2,4,896], index: 1, kind: input, shape index: {}]
  %s2 = inlined_call_operand.hbm [shape: f32[2,1,896], index: 2, kind: input, shape index: {}]
  %s3 = inlined_call_operand.hbm [shape: s32[2,192,896], index: 3, kind: input, shape index: {}]
  %s4 = inlined_call_operand.hbm [shape: s32[2,192,128], index: 4, kind: input, shape index: {}]
  %s5 = inlined_call_operand.hbm [shape: f32[2,1,128], index: 5, kind: output, shape index: {}]
  %s6 = sld [smem:[#allocation0]]
  $region73: #{tpu_custom_call.1} parent=0
    _
  %s8 = ssub.s32 1, %s6
  %s9 = scalar_select 0, %s8, %s6
  $region1: #{tpu_custom_call.1} parent=0
    #allocation2 [shape = 'u8[28672]{0}', space=vmem, size = 0x7000, scoped, tag = 'input window, operand 1']
    #allocation3 [shape = 's32[2]{0}', space=sflag, size = 0x8, scoped, tag = 'scoped memory for tpu_custom_call.1']
    #allocation4 [shape = 's32[2]{0}', space=sflag, size = 0x8, scoped, tag = 'scoped memory for tpu_custom_call.1']
    #allocation5 [shape = 'u8[7168]{0}', space=vmem, size = 0x1c00, scoped, tag = 'input window, operand 2']
    #allocation6 [shape = 's32[2]{0}', space=sflag, size = 0x8, scoped, tag = 'scoped memory for tpu_custom_call.1']
    #allocation7 [shape = 'u8[458752]{0}', space=vmem, size = 0x70000, scoped, tag = 'input window, operand 3']
    #allocation8 [shape = 'u8[65536]{0}', space=vmem, size = 0x10000, scoped, tag = 'input window, operand 4']
    #allocation9 [shape = 's32[2]{0}', space=sflag, size = 0x8, scoped, tag = 'scoped memory for tpu_custom_call.1']
    #allocation10 [shape = 'u8[1024]{0}', space=vmem, size = 0x400, scoped, tag = 'output window, operand 0']
    %10 = vsyncpa [#allocation3], 0
    %s11 = scalar_lea.sflag [#allocation3], 1
    %12 = vsyncpa %s11, 0
    %13 = vsyncpa [#allocation6], 0
    %s14 = scalar_lea.sflag [#allocation6], 1
    %15 = vsyncpa %s14, 0
    %16 = vsyncpa [#allocation9], 0
    %s17 = scalar_lea.sflag [#allocation9], 1
    %18 = vsyncpa %s17, 0
    %19 = vsyncpa [#allocation4], 0
    %s20 = scalar_lea.sflag [#allocation4], 1
    %21 = vsyncpa %s20, 0
    loop: start=0, step=1, limit=8
    $region2: #{tpu_custom_call.1} parent=1 // loop_pre_header
      _
    $region3: #{tpu_custom_call.1} parent=1 // loop_header
      %s23 = sphi 0, %s27
      %p24 = scmp.ge.s32.totalorder %s23, 8
      %s30 = sphi 0, %s42
      %s31 = sphi 0, %s38
      %s32 = sphi 0, %s30
      %s33 = sphi 0, %s31
      %s34 = sphi 0, %s32
      %s35 = sphi 0, %s33
      %s45 = sphi 0, %s47
      %s48 = sphi 0, %s45
      %s49 = sphi 0, %s48
      %s65 = sphi 0, %s49
      %s71 = sphi 0, %s73
      %s74 = sphi 0, %s71
      %s75 = sphi 0, %s74
      %s91 = sphi 0, %s75
      %s97 = sphi 0, %s99
      %s100 = sphi 0, %s97
      %s101 = sphi 0, %s100
      %s117 = sphi 0, %s101
      %s125 = sphi 0, %s127
      %s128 = sphi 0, %s125
      %s129 = sphi 0, %s128
      %s145 = sphi 0, %s129
      %s153 = sphi 0, %s155
      %s156 = sphi 0, %s153
      %s157 = sphi 0, %s156
      %s173 = sphi 0, %s157
      %s179 = sphi 0, %s181
      %s182 = sphi 0, %s179
      %s183 = sphi 0, %s182
      %s199 = sphi 0, %s183
    $region4: #{tpu_custom_call.1} parent=1 // loop_header_branch
      %26 = sbr.rel (%p24) target = $region8
    $region5: #{tpu_custom_call.1} parent=1 // loop_body
      %s28 = ssub.s32 %s23, 1
      %s29 = ssub.s32 %s23, 2
      %s36 = sadd.s32 1, %s31
      %p37 = scmp.ge.s32.totalorder %s36, 3
      %s38 = scalar_select %p37, 0, %s36
      %s39 = sadd.s32 1, %s30
      %s40 = scalar_select %p37, %s39, %s30
      %p41 = scmp.ge.s32.totalorder %s40, 2
      %s42 = scalar_select %p41, 0, %s40
      %s43 = ssub.s32 %s31, %s38
      %p44 = scmp.eq.s32.totalorder %s43, 0
      %s46 = sadd.s32 %s45, 1
      %s47 = scalar_select %p44, %s45, %s46
      %p50 = pneg %p44
      %p51 = scmp.eq.s32.totalorder %s23, 5
      %p52 = por %p50, %p51
      %p53 = scmp.ne.s32.totalorder %s45, %s48
      %p54 = scmp.eq.s32.totalorder %s23, 0
      %p55 = por %p53, %p54
      %p56 = scmp.ne.s32.totalorder %s45, %s48
      %p57 = scmp.eq.s32.totalorder %s28, 5
      %p58 = por %p56, %p57
      %p59 = scmp.ne.s32.totalorder %s48, %s49
      %p60 = scmp.eq.s32.totalorder %s28, 0
      %p61 = por %p59, %p60
      %p62 = scmp.ne.s32.totalorder %s48, %s49
      %p63 = scmp.eq.s32.totalorder %s29, 5
      %p64 = por %p62, %p63
      %p66 = scmp.ne.s32.totalorder %s49, %s65
      %p67 = scmp.eq.s32.totalorder %s29, 0
      %p68 = por %p66, %p67
      %s69 = ssub.s32 %s30, %s42
      %p70 = scmp.eq.s32.totalorder %s69, 0
      %s72 = sadd.s32 %s71, 1
      %s73 = scalar_select %p70, %s71, %s72
      %p76 = pneg %p70
      %p77 = scmp.eq.s32.totalorder %s23, 5
      %p78 = por %p76, %p77
      %p79 = scmp.ne.s32.totalorder %s71, %s74
      %p80 = scmp.eq.s32.totalorder %s23, 0
      %p81 = por %p79, %p80
      %p82 = scmp.ne.s32.totalorder %s71, %s74
      %p83 = scmp.eq.s32.totalorder %s28, 5
      %p84 = por %p82, %p83
      %p85 = scmp.ne.s32.totalorder %s74, %s75
      %p86 = scmp.eq.s32.totalorder %s28, 0
      %p87 = por %p85, %p86
      %p88 = scmp.ne.s32.totalorder %s74, %s75
      %p89 = scmp.eq.s32.totalorder %s29, 5
      %p90 = por %p88, %p89
      %p92 = scmp.ne.s32.totalorder %s75, %s91
      %p93 = scmp.eq.s32.totalorder %s29, 0
      %p94 = por %p92, %p93
      %s95 = ssub.s32 %s30, %s42
      %p96 = scmp.eq.s32.totalorder %s95, 0
      %s98 = sadd.s32 %s97, 1
      %s99 = scalar_select %p96, %s97, %s98
      %p102 = pneg %p96
      %p103 = scmp.eq.s32.totalorder %s23, 5
      %p104 = por %p102, %p103
      %p105 = scmp.ne.s32.totalorder %s97, %s100
      %p106 = scmp.eq.s32.totalorder %s23, 0
      %p107 = por %p105, %p106
      %p108 = scmp.ne.s32.totalorder %s97, %s100
      %p109 = scmp.eq.s32.totalorder %s28, 5
      %p110 = por %p108, %p109
      %p111 = scmp.ne.s32.totalorder %s100, %s101
      %p112 = scmp.eq.s32.totalorder %s28, 0
      %p113 = por %p111, %p112
      %p114 = scmp.ne.s32.totalorder %s100, %s101
      %p115 = scmp.eq.s32.totalorder %s29, 5
      %p116 = por %p114, %p115
      %p118 = scmp.ne.s32.totalorder %s101, %s117
      %p119 = scmp.eq.s32.totalorder %s29, 0
      %p120 = por %p118, %p119
      %s121 = ssub.s32 %s30, %s42
      %s122 = ssub.s32 %s31, %s38
      %s123 = sor.u32 %s121, %s122
      %p124 = scmp.eq.s32.totalorder %s123, 0
      %s126 = sadd.s32 %s125, 1
      %s127 = scalar_select %p124, %s125, %s126
      %p130 = pneg %p124
      %p131 = scmp.eq.s32.totalorder %s23, 5
      %p132 = por %p130, %p131
      %p133 = scmp.ne.s32.totalorder %s125, %s128
      %p134 = scmp.eq.s32.totalorder %s23, 0
      %p135 = por %p133, %p134
      %p136 = scmp.ne.s32.totalorder %s125, %s128
      %p137 = scmp.eq.s32.totalorder %s28, 5
      %p138 = por %p136, %p137
      %p139 = scmp.ne.s32.totalorder %s128, %s129
      %p140 = scmp.eq.s32.totalorder %s28, 0
      %p141 = por %p139, %p140
      %p142 = scmp.ne.s32.totalorder %s128, %s129
      %p143 = scmp.eq.s32.totalorder %s29, 5
      %p144 = por %p142, %p143
      %p146 = scmp.ne.s32.totalorder %s129, %s145
      %p147 = scmp.eq.s32.totalorder %s29, 0
      %p148 = por %p146, %p147
      %s149 = ssub.s32 %s30, %s42
      %s150 = ssub.s32 %s31, %s38
      %s151 = sor.u32 %s149, %s150
      %p152 = scmp.eq.s32.totalorder %s151, 0
      %s154 = sadd.s32 %s153, 1
      %s155 = scalar_select %p152, %s153, %s154
      %p158 = pneg %p152
      %p159 = scmp.eq.s32.totalorder %s23, 5
      %p160 = por %p158, %p159
      %p161 = scmp.ne.s32.totalorder %s153, %s156
      %p162 = scmp.eq.s32.totalorder %s23, 0
      %p163 = por %p161, %p162
      %p164 = scmp.ne.s32.totalorder %s153, %s156
      %p165 = scmp.eq.s32.totalorder %s28, 5
      %p166 = por %p164, %p165
      %p167 = scmp.ne.s32.totalorder %s156, %s157
      %p168 = scmp.eq.s32.totalorder %s28, 0
      %p169 = por %p167, %p168
      %p170 = scmp.ne.s32.totalorder %s156, %s157
      %p171 = scmp.eq.s32.totalorder %s29, 5
      %p172 = por %p170, %p171
      %p174 = scmp.ne.s32.totalorder %s157, %s173
      %p175 = scmp.eq.s32.totalorder %s29, 0
      %p176 = por %p174, %p175
      %s177 = ssub.s32 %s30, %s42
      %p178 = scmp.eq.s32.totalorder %s177, 0
      %s180 = sadd.s32 %s179, 1
      %s181 = scalar_select %p178, %s179, %s180
      %p184 = pneg %p178
      %p185 = scmp.eq.s32.totalorder %s23, 5
      %p186 = por %p184, %p185
      %p187 = scmp.ne.s32.totalorder %s179, %s182
      %p188 = scmp.eq.s32.totalorder %s23, 0
      %p189 = por %p187, %p188
      %p190 = scmp.ne.s32.totalorder %s179, %s182
      %p191 = scmp.eq.s32.totalorder %s28, 5
      %p192 = por %p190, %p191
      %p193 = scmp.ne.s32.totalorder %s182, %s183
      %p194 = scmp.eq.s32.totalorder %s28, 0
      %p195 = por %p193, %p194
      %p196 = scmp.ne.s32.totalorder %s182, %s183
      %p197 = scmp.eq.s32.totalorder %s29, 5
      %p198 = por %p196, %p197
      %p200 = scmp.ne.s32.totalorder %s183, %s199
      %p201 = scmp.eq.s32.totalorder %s29, 0
      %p202 = por %p200, %p201
      %p203 = scmp.le.s32.totalorder 1, %s23
      %p204 = scmp.lt.s32.totalorder %s23, 7
      %p205 = pnand %p203, %p204
      %p206 = pneg %p205
      // Predicated region
      $region9: #{tpu_custom_call.1} parent=5 // pred_check
        _
      $region10: #{tpu_custom_call.1} parent=5 // pred_check_branch
        %208 = sbr.rel (%p205) target = $region12
      $region11: #{tpu_custom_call.1} parent=5 // pred_region
        %s209 = ssub.s32 %s23, 1
      $region12: #{tpu_custom_call.1} parent=5 // pred_fallthru
        _
      %p210 = scmp.lt.s32.totalorder %s23, 6
      // Predicated region
      $region13: #{tpu_custom_call.1} parent=5 // pred_check
        %p211 = pneg %p210
      $region14: #{tpu_custom_call.1} parent=5 // pred_check_branch
        %213 = sbr.rel (%p211) target = $region16
      $region15: #{tpu_custom_call.1} parent=5 // pred_region
        // Predicated region
        $region17: #{tpu_custom_call.1} parent=15 // pred_check
          %p214 = pneg %p55
        $region18: #{tpu_custom_call.1} parent=15 // pred_check_branch
          %216 = sbr.rel (%p214) target = $region20
        $region19: #{tpu_custom_call.1} parent=15 // pred_region
          %s217 = smul.u32 8, %s31
          %p218 = scmp.lt.s32.totalorder %s217, 23
          %s219 = scalar_select %p218, %s217, 23
          %s220 = smul.addr %s219, 8
          %s221 = scalar_lea.vmem %s0, %s220
          %s222 = smul.u32 8, %s31
        $region20: #{tpu_custom_call.1} parent=15 // pred_fallthru
          _
        // Predicated region
        $region21: #{tpu_custom_call.1} parent=15 // pred_check
          %p223 = pneg %p81
        $region22: #{tpu_custom_call.1} parent=15 // pred_check_branch
          %225 = sbr.rel (%p223) target = $region24
        $region23: #{tpu_custom_call.1} parent=15 // pred_region
          %s226 = sand.u32 %s71, 1
          %s227 = scalar_lea.sflag [#allocation3], %s226
          %s228 = sand.u32 %s71, 1
          %s229 = smul.addr %s228, 28
          %s230 = scalar_lea.vmem [#allocation2], %s229
          %s232 = ssub.s32 448, 448
          %233 = vsyncadd %s227, %s232
          %s234 = smul.addr %s30, 7
          %s235 = smul.addr %s234, 64
          %s236 = scalar_lea.hbm %s1, %s235
          %s238 = sshll.u32 %s230, 4
          %s239 = int_to_ptr.vmem [resolvable:$true] %s238
          %241 = dma.hbm_to_vmem [thread:$0]  %s236, 448, %s239, %s227
        $region24: #{tpu_custom_call.1} parent=15 // pred_fallthru
          _
        // Predicated region
        $region25: #{tpu_custom_call.1} parent=15 // pred_check
          %p242 = pneg %p107
        $region26: #{tpu_custom_call.1} parent=15 // pred_check_branch
          %244 = sbr.rel (%p242) target = $region28
        $region27: #{tpu_custom_call.1} parent=15 // pred_region
          %s245 = sand.u32 %s23, 1
          %s246 = scalar_lea.sflag [#allocation6], %s245
          %s247 = sand.u32 %s97, 1
          %s248 = smul.addr %s247, 7
          %s249 = scalar_lea.vmem [#allocation5], %s248
          %s251 = ssub.s32 112, 112
          %252 = vsyncadd %s246, %s251
          %s253 = smul.addr %s30, 7
          %s254 = smul.addr %s253, 16
          %s255 = scalar_lea.hbm %s2, %s254
          %s257 = sshll.u32 %s249, 4
          %s258 = int_to_ptr.vmem [resolvable:$true] %s257
          %260 = dma.hbm_to_vmem [thread:$0]  %s255, 112, %s258, %s246
        $region28: #{tpu_custom_call.1} parent=15 // pred_fallthru
          _
        // Predicated region
        $region29: #{tpu_custom_call.1} parent=15 // pred_check
          %p261 = pneg %p135
        $region30: #{tpu_custom_call.1} parent=15 // pred_check_branch
          %263 = sbr.rel (%p261) target = $region32
        $region31: #{tpu_custom_call.1} parent=15 // pred_region
          %s264 = sand.u32 %s23, 1
          %s265 = scalar_lea.sflag [#allocation6], %s264
          %s266 = sand.u32 %s125, 1
          %s267 = smul.addr %s266, 448
          %s268 = scalar_lea.vmem [#allocation7], %s267
          %s269 = smul.u32 8, %s31
          %s271 = ssub.s32 7168, 7168
          %272 = vsyncadd %s265, %s271
          %s273 = smul.addr %s269, 7
          %s274 = smul.addr %s30, 168
          %s275 = sadd.s32 %s273, %s274
          %s276 = smul.addr %s275, 128
          %s277 = scalar_lea.hbm %s3, %s276
          %s278 = sshll.u32 %s268, 4
          %s279 = int_to_ptr.vmem [resolvable:$true] %s278
          %284 = dma.hbm_to_vmem [thread:$0]  %s277, 7168, %s279, %s265, 896, 896, 56
        $region32: #{tpu_custom_call.1} parent=15 // pred_fallthru
          _
        // Predicated region
        $region33: #{tpu_custom_call.1} parent=15 // pred_check
          %p285 = pneg %p163
        $region34: #{tpu_custom_call.1} parent=15 // pred_check_branch
          %287 = sbr.rel (%p285) target = $region36
        $region35: #{tpu_custom_call.1} parent=15 // pred_region
          %s288 = sand.u32 %s153, 1
          %s289 = scalar_lea.sflag [#allocation9], %s288
          %s290 = sand.u32 %s153, 1
          %s291 = smul.addr %s290, 64
          %s292 = scalar_lea.vmem [#allocation8], %s291
          %s293 = smul.u32 8, %s31
          %s295 = ssub.s32 1024, 1024
          %296 = vsyncadd %s289, %s295
          %s297 = smul.addr %s30, 24
          %s298 = sadd.s32 %s293, %s297
          %s299 = smul.addr %s298, 128
          %s300 = scalar_lea.hbm %s4, %s299
          %s301 = sshll.u32 %s292, 4
          %s302 = int_to_ptr.vmem [resolvable:$true] %s301
          %307 = dma.hbm_to_vmem [thread:$0]  %s300, 1024, %s302, %s289, 128, 128, 8
        $region36: #{tpu_custom_call.1} parent=15 // pred_fallthru
          _
      $region16: #{tpu_custom_call.1} parent=5 // pred_fallthru
        _
      %p308 = scmp.le.s32.totalorder 1, %s23
      %p309 = scmp.lt.s32.totalorder %s23, 7
      %p310 = pnand %p308, %p309
      %p311 = pneg %p310
      // Predicated region
      $region37: #{tpu_custom_call.1} parent=5 // pred_check
        _
      $region38: #{tpu_custom_call.1} parent=5 // pred_check_branch
        %313 = sbr.rel (%p310) target = $region40
      $region39: #{tpu_custom_call.1} parent=5 // pred_region
        %s314 = ssub.s32 %s23, 1
        %s315 = sand.u32 %s74, 1
        %s316 = scalar_lea.sflag [#allocation3], %s315
        %s317 = sand.u32 %s74, 1
        %s318 = smul.addr %s317, 28
        %s319 = scalar_lea.vmem [#allocation2], %s318
        // Predicated region
        $region41: #{tpu_custom_call.1} parent=39 // pred_check
          %p320 = pneg %p87
        $region42: #{tpu_custom_call.1} parent=39 // pred_check_branch
          %322 = sbr.rel (%p320) target = $region44
        $region43: #{tpu_custom_call.1} parent=39 // pred_region
          %323 = dma.done %s316, 448
        $region44: #{tpu_custom_call.1} parent=39 // pred_fallthru
          _
        %s324 = sand.u32 %s28, 1
        %s325 = scalar_lea.sflag [#allocation6], %s324
        %s326 = sand.u32 %s100, 1
        %s327 = smul.addr %s326, 7
        %s328 = scalar_lea.vmem [#allocation5], %s327
        // Predicated region
        $region45: #{tpu_custom_call.1} parent=39 // pred_check
          %p329 = pneg %p113
        $region46: #{tpu_custom_call.1} parent=39 // pred_check_branch
          %331 = sbr.rel (%p329) target = $region48
        $region47: #{tpu_custom_call.1} parent=39 // pred_region
          %332 = dma.done %s325, 112
        $region48: #{tpu_custom_call.1} parent=39 // pred_fallthru
          _
        %s333 = sand.u32 %s28, 1
        %s334 = scalar_lea.sflag [#allocation6], %s333
        %s335 = sand.u32 %s128, 1
        %s336 = smul.addr %s335, 448
        %s337 = scalar_lea.vmem [#allocation7], %s336
        // Predicated region
        $region49: #{tpu_custom_call.1} parent=39 // pred_check
          %p338 = pneg %p141
        $region50: #{tpu_custom_call.1} parent=39 // pred_check_branch
          %340 = sbr.rel (%p338) target = $region52
        $region51: #{tpu_custom_call.1} parent=39 // pred_region
          %341 = dma.done %s334, 7168
        $region52: #{tpu_custom_call.1} parent=39 // pred_fallthru
          _
        %s342 = sand.u32 %s156, 1
        %s343 = scalar_lea.sflag [#allocation9], %s342
        %s344 = sand.u32 %s156, 1
        %s345 = smul.addr %s344, 64
        %s346 = scalar_lea.vmem [#allocation8], %s345
        // Predicated region
        $region53: #{tpu_custom_call.1} parent=39 // pred_check
          %p347 = pneg %p169
        $region54: #{tpu_custom_call.1} parent=39 // pred_check_branch
          %349 = sbr.rel (%p347) target = $region56
        $region55: #{tpu_custom_call.1} parent=39 // pred_region
          %350 = dma.done %s343, 1024
        $region56: #{tpu_custom_call.1} parent=39 // pred_fallthru
          _
        %s351 = smul.u32 8, %s33
        %p352 = scmp.lt.s32.totalorder %s351, 23
        %s353 = scalar_select %p352, %s351, 23
        %s354 = smul.addr %s353, 8
        %s355 = scalar_lea.vmem %s0, %s354
        %p356 = pneg %p61
        %p357 = pneg %p58
        %s358 = sand.u32 %s74, 1
        %s359 = scalar_lea.sflag [#allocation3], %s358
        %s360 = sand.u32 %s74, 1
        %s361 = smul.addr %s360, 28
        %s362 = scalar_lea.vmem [#allocation2], %s361
        %p363 = pneg %p87
        %p364 = pneg %p84
        %s365 = sand.u32 %s28, 1
        %s366 = scalar_lea.sflag [#allocation6], %s365
        %s367 = sand.u32 %s100, 1
        %s368 = smul.addr %s367, 7
        %s369 = scalar_lea.vmem [#allocation5], %s368
        %p370 = pneg %p113
        %p371 = pneg %p110
        %s372 = sand.u32 %s28, 1
        %s373 = scalar_lea.sflag [#allocation6], %s372
        %s374 = sand.u32 %s128, 1
        %s375 = smul.addr %s374, 448
        %s376 = scalar_lea.vmem [#allocation7], %s375
        %p377 = pneg %p141
        %p378 = pneg %p138
        %s379 = sand.u32 %s156, 1
        %s380 = scalar_lea.sflag [#allocation9], %s379
        %s381 = sand.u32 %s156, 1
        %s382 = smul.addr %s381, 64
        %s383 = scalar_lea.vmem [#allocation8], %s382
        %p384 = pneg %p169
        %p385 = pneg %p166
        %p386 = pneg %p195
        %p387 = pneg %p192
        %s388 = sand.u32 %s182, 1
        %s389 = scalar_lea.sflag [#allocation4], %s388
        %s390 = sand.u32 %s182, 1
        %s391 = scalar_lea.vmem [#allocation10], %s390
        %s392 = smul.u32 8, %s33
        %p393 = scmp.lt.s32.totalorder %s392, 23
        %s394 = scalar_select %p393, %s392, 23
        %s395 = smul.addr %s394, 8
        %s396 = scalar_lea.vmem %s0, %s395
        %s397 = smul.u32 8, %s33
        %s398 = smul.u32 8, %s33
        %s399 = smul.u32 8, %s33
        %p400 = scmp.eq.s32.totalorder %s33, 0
        // Predicated region
        $region57: #{tpu_custom_call.1} parent=39 // pred_check
          %p401 = pneg %p400
        $region58: #{tpu_custom_call.1} parent=39 // pred_check_branch
          %403 = sbr.rel (%p401) target = $region60
        $region59: #{tpu_custom_call.1} parent=39 // pred_region
          %404 = vst [vmem:[%s391] sm:$0x1] 0.0
        $region60: #{tpu_custom_call.1} parent=39 // pred_fallthru
          _
        %v405 = vld [vmem:[%s396] sm:$0xff]
        %v406 = vld [vmem:[%s396 + $0x8] sm:$0xff]
        %v407 = vld [vmem:[%s396 + $0x10] sm:$0xff]
        %v408 = vld [vmem:[%s396 + $0x18] sm:$0xff]
        %v409 = vld [vmem:[%s396 + $0x20] sm:$0xff]
        %v410 = vld [vmem:[%s396 + $0x28] sm:$0xff]
        %v411 = vld [vmem:[%s396 + $0x30] sm:$0xff]
        %v412 = vld [vmem:[%s396 + $0x38] sm:$0xff]
        %v413 = vld [vmem:[%s319] sm:$0xff]
        %v414 = vld [vmem:[%s319 + $0x8] sm:$0xff]
        %v415 = vld [vmem:[%s319 + $0x10] sm:$0xff]
        %v416 = vld [vmem:[%s319 + $0x18] sm:$0xf]
        %v417 = vld [vmem:[%s328] sm:$0xff]
        %v418 = vld [vmem:[%s337] sm:$0xff]
        %v419 = vld [vmem:[%s337 + $0x8] sm:$0xff]
        %v420 = vld [vmem:[%s337 + $0x10] sm:$0xff]
        %v421 = vld [vmem:[%s337 + $0x18] sm:$0xff]
        %v422 = vld [vmem:[%s337 + $0x20] sm:$0xff]
        %v423 = vld [vmem:[%s337 + $0x28] sm:$0xff]
        %v424 = vld [vmem:[%s337 + $0x30] sm:$0xff]
        %v425 = vld [vmem:[%s337 + $0x38] sm:$0xff]
        %v426 = vld [vmem:[%s337 + $0x40] sm:$0xff]
        %v427 = vld [vmem:[%s337 + $0x48] sm:$0xff]
        %v428 = vld [vmem:[%s337 + $0x50] sm:$0xff]
        %v429 = vld [vmem:[%s337 + $0x58] sm:$0xff]
        %v430 = vld [vmem:[%s337 + $0x60] sm:$0xff]
        %v431 = vld [vmem:[%s337 + $0x68] sm:$0xff]
        %v432 = vld [vmem:[%s337 + $0x70] sm:$0xff]
        %v433 = vld [vmem:[%s337 + $0x78] sm:$0xff]
        %v434 = vld [vmem:[%s337 + $0x80] sm:$0xff]
        %v435 = vld [vmem:[%s337 + $0x88] sm:$0xff]
        %v436 = vld [vmem:[%s337 + $0x90] sm:$0xff]
        %v437 = vld [vmem:[%s337 + $0x98] sm:$0xff]
        %v438 = vld [vmem:[%s337 + $0xa0] sm:$0xff]
        %v439 = vld [vmem:[%s337 + $0xa8] sm:$0xff]
        %v440 = vld [vmem:[%s337 + $0xb0] sm:$0xff]
        %v441 = vld [vmem:[%s337 + $0xb8] sm:$0xff]
        %v442 = vld [vmem:[%s337 + $0xc0] sm:$0xff]
        %v443 = vld [vmem:[%s337 + $0xc8] sm:$0xff]
        %v444 = vld [vmem:[%s337 + $0xd0] sm:$0xff]
        %v445 = vld [vmem:[%s337 + $0xd8] sm:$0xff]
        %v446 = vld [vmem:[%s337 + $0xe0] sm:$0xff]
        %v447 = vld [vmem:[%s337 + $0xe8] sm:$0xff]
        %v448 = vld [vmem:[%s337 + $0xf0] sm:$0xff]
        %v449 = vld [vmem:[%s337 + $0xf8] sm:$0xff]
        %v450 = vld [vmem:[%s337 + $0x100] sm:$0xff]
        %v451 = vld [vmem:[%s337 + $0x108] sm:$0xff]
        %v452 = vld [vmem:[%s337 + $0x110] sm:$0xff]
        %v453 = vld [vmem:[%s337 + $0x118] sm:$0xff]
        %v454 = vld [vmem:[%s337 + $0x120] sm:$0xff]
        %v455 = vld [vmem:[%s337 + $0x128] sm:$0xff]
        %v456 = vld [vmem:[%s337 + $0x130] sm:$0xff]
        %v457 = vld [vmem:[%s337 + $0x138] sm:$0xff]
        %v458 = vld [vmem:[%s337 + $0x140] sm:$0xff]
        %v459 = vld [vmem:[%s337 + $0x148] sm:$0xff]
        %v460 = vld [vmem:[%s337 + $0x150] sm:$0xff]
        %v461 = vld [vmem:[%s337 + $0x158] sm:$0xff]
        %v462 = vld [vmem:[%s337 + $0x160] sm:$0xff]
        %v463 = vld [vmem:[%s337 + $0x168] sm:$0xff]
        %v464 = vld [vmem:[%s337 + $0x170] sm:$0xff]
        %v465 = vld [vmem:[%s337 + $0x178] sm:$0xff]
        %v466 = vld [vmem:[%s337 + $0x180] sm:$0xff]
        %v467 = vld [vmem:[%s337 + $0x188] sm:$0xff]
        %v468 = vld [vmem:[%s337 + $0x190] sm:$0xff]
        %v469 = vld [vmem:[%s337 + $0x198] sm:$0xff]
        %v470 = vld [vmem:[%s337 + $0x1a0] sm:$0xff]
        %v471 = vld [vmem:[%s337 + $0x1a8] sm:$0xff]
        %v472 = vld [vmem:[%s337 + $0x1b0] sm:$0xff]
        %v473 = vld [vmem:[%s337 + $0x1b8] sm:$0xff]
        %v474 = vcvt.s32.f32 %v418
        %v475 = vcvt.s32.f32 %v419
        %v476 = vcvt.s32.f32 %v420
        %v477 = vcvt.s32.f32 %v421
        %v478 = vcvt.s32.f32 %v422
        %v479 = vcvt.s32.f32 %v423
        %v480 = vcvt.s32.f32 %v424
        %v481 = vcvt.s32.f32 %v425
        %v482 = vcvt.s32.f32 %v426
        %v483 = vcvt.s32.f32 %v427
        %v484 = vcvt.s32.f32 %v428
        %v485 = vcvt.s32.f32 %v429
        %v486 = vcvt.s32.f32 %v430
        %v487 = vcvt.s32.f32 %v431
        %v488 = vcvt.s32.f32 %v432
        %v489 = vcvt.s32.f32 %v433
        %v490 = vcvt.s32.f32 %v434
        %v491 = vcvt.s32.f32 %v435
        %v492 = vcvt.s32.f32 %v436
        %v493 = vcvt.s32.f32 %v437
        %v494 = vcvt.s32.f32 %v438
        %v495 = vcvt.s32.f32 %v439
        %v496 = vcvt.s32.f32 %v440
        %v497 = vcvt.s32.f32 %v441
        %v498 = vcvt.s32.f32 %v442
        %v499 = vcvt.s32.f32 %v443
        %v500 = vcvt.s32.f32 %v444
        %v501 = vcvt.s32.f32 %v445
        %v502 = vcvt.s32.f32 %v446
        %v503 = vcvt.s32.f32 %v447
        %v504 = vcvt.s32.f32 %v448
        %v505 = vcvt.s32.f32 %v449
        %v506 = vcvt.s32.f32 %v450
        %v507 = vcvt.s32.f32 %v451
        %v508 = vcvt.s32.f32 %v452
        %v509 = vcvt.s32.f32 %v453
        %v510 = vcvt.s32.f32 %v454
        %v511 = vcvt.s32.f32 %v455
        %v512 = vcvt.s32.f32 %v456
        %v513 = vcvt.s32.f32 %v457
        %v514 = vcvt.s32.f32 %v458
        %v515 = vcvt.s32.f32 %v459
        %v516 = vcvt.s32.f32 %v460
        %v517 = vcvt.s32.f32 %v461
        %v518 = vcvt.s32.f32 %v462
        %v519 = vcvt.s32.f32 %v463
        %v520 = vcvt.s32.f32 %v464
        %v521 = vcvt.s32.f32 %v465
        %v522 = vcvt.s32.f32 %v466
        %v523 = vcvt.s32.f32 %v467
        %v524 = vcvt.s32.f32 %v468
        %v525 = vcvt.s32.f32 %v469
        %v526 = vcvt.s32.f32 %v470
        %v527 = vcvt.s32.f32 %v471
        %v528 = vcvt.s32.f32 %v472
        %v529 = vcvt.s32.f32 %v473
        %v530 = vld [vmem:[%s346] sm:$0xff]
        %v531 = vld [vmem:[%s346 + $0x8] sm:$0xff]
        %v532 = vld [vmem:[%s346 + $0x10] sm:$0xff]
        %v533 = vld [vmem:[%s346 + $0x18] sm:$0xff]
        %v534 = vld [vmem:[%s346 + $0x20] sm:$0xff]
        %v535 = vld [vmem:[%s346 + $0x28] sm:$0xff]
        %v536 = vld [vmem:[%s346 + $0x30] sm:$0xff]
        %v537 = vld [vmem:[%s346 + $0x38] sm:$0xff]
        %v538 = vcvt.s32.f32 %v530
        %v539 = vcvt.s32.f32 %v531
        %v540 = vcvt.s32.f32 %v532
        %v541 = vcvt.s32.f32 %v533
        %v542 = vcvt.s32.f32 %v534
        %v543 = vcvt.s32.f32 %v535
        %v544 = vcvt.s32.f32 %v536
        %v545 = vcvt.s32.f32 %v537
        %v547 = vlaneseq
        %v548 = vshrl.u32 %v547, 7
        %v549 = vsub.s32 0, %v548
        %v550 = vrot.slane %v417, %v549
        %v551 = vlaneseq
        %v552 = vshrl.u32 %v551, 7
        %v553 = vsub.s32 1, %v552
        %v554 = vrot.slane %v417, %v553
        %v555 = vlaneseq
        %v556 = vshrl.u32 %v555, 7
        %v557 = vsub.s32 2, %v556
        %v558 = vrot.slane %v417, %v557
        %v559 = vlaneseq
        %v560 = vshrl.u32 %v559, 7
        %v561 = vsub.s32 3, %v560
        %v562 = vrot.slane %v417, %v561
        %v563 = vlaneseq
        %v564 = vshrl.u32 %v563, 7
        %v565 = vsub.s32 4, %v564
        %v566 = vrot.slane %v417, %v565
        %v567 = vlaneseq
        %v568 = vshrl.u32 %v567, 7
        %v569 = vsub.s32 5, %v568
        %v570 = vrot.slane %v417, %v569
        %v571 = vlaneseq
        %v572 = vshrl.u32 %v571, 7
        %v573 = vsub.s32 6, %v572
        %v574 = vrot.slane %v417, %v573
        %v586 = vcombine.high %v413, %v413
        %v587 = vcombine.high %v414, %v414
        %v588 = vcombine.high %v415, %v415
        %vm589 = vcmask 31744
        %v591 = vsel %vm589, %v405, 0
        %v594 = vsel %vm589, %v406, 0
        %v597 = vsel %vm589, %v407, 0
        %v600 = vsel %vm589, %v408, 0
        %v603 = vsel %vm589, %v409, 0
        %v606 = vsel %vm589, %v410, 0
        %v609 = vsel %vm589, %v411, 0
        %v612 = vsel %vm589, %v412, 0
        %vm614 = vcmask 1043456
        %v615 = vsel %vm614, %v413, 0
        %v617 = vsel %vm614, %v586, 0
        %v619 = vsel %vm614, %v414, 0
        %v621 = vsel %vm614, %v587, 0
        %v623 = vsel %vm614, %v415, 0
        %v625 = vsel %vm614, %v588, 0
        %v627 = vsel %vm614, %v416, 0
        %629 = vmatprep.subr.mxu0 %v617
        %630 = vmatpush1.msra.mxu0 %v615
        %631 = vmatprep.subr.mxu0 0.0
        %632 = vmatpush1.msra.mxu0 0.0
        %633 = vmatprep.subr.mxu0 0.0
        %634 = vmatpush1.msra.mxu0 0.0
        %635 = vmatprep.subr.mxu0 0.0
        %636 = vmatpush1.msra.mxu0 0.0
        %637 = vmatprep.subr.mxu0 0.0
        %638 = vmatpush1.msra.mxu0 0.0
        %639 = vmatprep.subr.mxu0 0.0
        %640 = vmatpush1.msra.mxu0 0.0
        %641 = vmatprep.subr.mxu0 0.0
        %642 = vmatpush1.msra.mxu0 0.0
        %643 = vmatprep.subr.mxu0 0.0
        %644 = vmatpush1.msra.mxu0 0.0
        %645 = vmatprep.subr.mxu0 0.0
        %646 = vmatpush1.msra.mxu0 0.0
        %647 = vmatprep.subr.mxu0 0.0
        %648 = vmatpush1.msra.mxu0 0.0
        %649 = vmatprep.subr.mxu0 0.0
        %650 = vmatpush1.msra.mxu0 0.0
        %651 = vmatprep.subr.mxu0 0.0
        %652 = vmatpush1.msra.mxu0 0.0
        %653 = vmatprep.subr.mxu0 0.0
        %654 = vmatpush1.msra.mxu0 0.0
        %655 = vmatprep.subr.mxu0 0.0
        %656 = vmatpush1.msra.mxu0 0.0
        %657 = vmatprep.subr.mxu0 0.0
        %658 = vmatpush1.msra.mxu0 0.0
        %659 = vmatprep.subr.mxu0 0.0
        %660 = vmatpush1.msra.mxu0 0.0
        %661 = vmatprep.subr.mxu0 0.0
        %662 = vmatpush1.msra.mxu0 0.0
        %663 = vmatprep.subr.mxu0 0.0
        %664 = vmatpush1.msra.mxu0 0.0
        %665 = vmatprep.subr.mxu0 0.0
        %666 = vmatpush1.msra.mxu0 0.0
        %667 = vmatprep.subr.mxu0 0.0
        %668 = vmatpush1.msra.mxu0 0.0
        %669 = vmatprep.subr.mxu0 0.0
        %670 = vmatpush1.msra.mxu0 0.0
        %671 = vmatprep.subr.mxu0 0.0
        %672 = vmatpush1.msra.mxu0 0.0
        %673 = vmatprep.subr.mxu0 0.0
        %674 = vmatpush1.msra.mxu0 0.0
        %675 = vmatprep.subr.mxu0 0.0
        %676 = vmatpush1.msra.mxu0 0.0
        %677 = vmatprep.subr.mxu0 0.0
        %678 = vmatpush1.msra.mxu0 0.0
        %679 = vmatprep.subr.mxu0 0.0
        %680 = vmatpush1.msra.mxu0 0.0
        %681 = vmatprep.subr.mxu0 0.0
        %682 = vmatpush1.msra.mxu0 0.0
        %683 = vmatprep.subr.mxu0 0.0
        %684 = vmatpush1.msra.mxu0 0.0
        %685 = vmatprep.subr.mxu0 0.0
        %686 = vmatpush1.msra.mxu0 0.0
        %687 = vmatprep.subr.mxu0 0.0
        %688 = vmatpush1.msra.mxu0 0.0
        %689 = vmatprep.subr.mxu0 0.0
        %690 = vmatpush1.msra.mxu0 0.0
        %691 = vmatprep.subr.mxu0 0.0
        %692 = vmatpush1.msra.mxu0 0.0
        %693 = vmatprep.mubr.f32.mxu0 0.0
        %694 = vmatmul.mubr.f32.gmra.mrb[0].mxu0 %v591
        %v695 = vpop.f32.mrb[0].mxu0
        %v696 = vadd.f32 %v550, %v695
        %v697 = vpop.f32.mrb[0].mxu0
        %v698 = vadd.f32 %v554, %v697
        %699 = vmatprep.mubr.f32.mxu0 0.0
        %700 = vmatmul.mubr.f32.gmra.mrb[0].mxu0 %v594
        %v701 = vpop.f32.mrb[0].mxu0
        %v702 = vadd.f32 %v550, %v701
        %v703 = vpop.f32.mrb[0].mxu0
        %v704 = vadd.f32 %v554, %v703
        %705 = vmatprep.mubr.f32.mxu0 0.0
        %706 = vmatmul.mubr.f32.gmra.mrb[0].mxu0 %v597
        %v707 = vpop.f32.mrb[0].mxu0
        %v708 = vadd.f32 %v550, %v707
        %v709 = vpop.f32.mrb[0].mxu0
        %v710 = vadd.f32 %v554, %v709
        %711 = vmatprep.mubr.f32.mxu0 0.0
        %712 = vmatmul.mubr.f32.gmra.mrb[0].mxu0 %v600
        %v713 = vpop.f32.mrb[0].mxu0
        %v714 = vadd.f32 %v550, %v713
        %v715 = vpop.f32.mrb[0].mxu0
        %v716 = vadd.f32 %v554, %v715
        %717 = vmatprep.mubr.f32.mxu0 0.0
        %718 = vmatmul.mubr.f32.gmra.mrb[0].mxu0 %v603
        %v719 = vpop.f32.mrb[0].mxu0
        %v720 = vadd.f32 %v550, %v719
        %v721 = vpop.f32.mrb[0].mxu0
        %v722 = vadd.f32 %v554, %v721
        %723 = vmatprep.mubr.f32.mxu0 0.0
        %724 = vmatmul.mubr.f32.gmra.mrb[0].mxu0 %v606
        %v725 = vpop.f32.mrb[0].mxu0
        %v726 = vadd.f32 %v550, %v725
        %v727 = vpop.f32.mrb[0].mxu0
        %v728 = vadd.f32 %v554, %v727
        %729 = vmatprep.mubr.f32.mxu0 0.0
        %730 = vmatmul.mubr.f32.gmra.mrb[0].mxu0 %v609
        %v731 = vpop.f32.mrb[0].mxu0
        %v732 = vadd.f32 %v550, %v731
        %v733 = vpop.f32.mrb[0].mxu0
        %v734 = vadd.f32 %v554, %v733
        %735 = vmatprep.mubr.f32.mxu0 0.0
        %736 = vmatmul.mubr.f32.gmra.mrb[0].mxu0 %v612
        %v737 = vpop.f32.mrb[0].mxu0
        %v738 = vadd.f32 %v550, %v737
        %v739 = vpop.f32.mrb[0].mxu0
        %v740 = vadd.f32 %v554, %v739
        %741 = vdwg.mxu0
        %742 = vmatprep.subr.mxu0 %v621
        %743 = vmatpush1.msra.mxu0 %v619
        %744 = vmatprep.subr.mxu0 0.0
        %745 = vmatpush1.msra.mxu0 0.0
        %746 = vmatprep.subr.mxu0 0.0
        %747 = vmatpush1.msra.mxu0 0.0
        %748 = vmatprep.subr.mxu0 0.0
        %749 = vmatpush1.msra.mxu0 0.0
        %750 = vmatprep.subr.mxu0 0.0
        %751 = vmatpush1.msra.mxu0 0.0
        %752 = vmatprep.subr.mxu0 0.0
        %753 = vmatpush1.msra.mxu0 0.0
        %754 = vmatprep.subr.mxu0 0.0
        %755 = vmatpush1.msra.mxu0 0.0
        %756 = vmatprep.subr.mxu0 0.0
        %757 = vmatpush1.msra.mxu0 0.0
        %758 = vmatprep.subr.mxu0 0.0
        %759 = vmatpush1.msra.mxu0 0.0
        %760 = vmatprep.subr.mxu0 0.0
        %761 = vmatpush1.msra.mxu0 0.0
        %762 = vmatprep.subr.mxu0 0.0
        %763 = vmatpush1.msra.mxu0 0.0
        %764 = vmatprep.subr.mxu0 0.0
        %765 = vmatpush1.msra.mxu0 0.0
        %766 = vmatprep.subr.mxu0 0.0
        %767 = vmatpush1.msra.mxu0 0.0
        %768 = vmatprep.subr.mxu0 0.0
        %769 = vmatpush1.msra.mxu0 0.0
        %770 = vmatprep.subr.mxu0 0.0
        %771 = vmatpush1.msra.mxu0 0.0
        %772 = vmatprep.subr.mxu0 0.0
        %773 = vmatpush1.msra.mxu0 0.0
        %774 = vmatprep.subr.mxu0 0.0
        %775 = vmatpush1.msra.mxu0 0.0
        %776 = vmatprep.subr.mxu0 0.0
        %777 = vmatpush1.msra.mxu0 0.0
        %778 = vmatprep.subr.mxu0 0.0
        %779 = vmatpush1.msra.mxu0 0.0
        %780 = vmatprep.subr.mxu0 0.0
        %781 = vmatpush1.msra.mxu0 0.0
        %782 = vmatprep.subr.mxu0 0.0
        %783 = vmatpush1.msra.mxu0 0.0
        %784 = vmatprep.subr.mxu0 0.0
        %785 = vmatpush1.msra.mxu0 0.0
        %786 = vmatprep.subr.mxu0 0.0
        %787 = vmatpush1.msra.mxu0 0.0
        %788 = vmatprep.subr.mxu0 0.0
        %789 = vmatpush1.msra.mxu0 0.0
        %790 = vmatprep.subr.mxu0 0.0
        %791 = vmatpush1.msra.mxu0 0.0
        %792 = vmatprep.subr.mxu0 0.0
        %793 = vmatpush1.msra.mxu0 0.0
        %794 = vmatprep.subr.mxu0 0.0
        %795 = vmatpush1.msra.mxu0 0.0
        %796 = vmatprep.subr.mxu0 0.0
        %797 = vmatpush1.msra.mxu0 0.0
        %798 = vmatprep.subr.mxu0 0.0
        %799 = vmatpush1.msra.mxu0 0.0
        %800 = vmatprep.subr.mxu0 0.0
        %801 = vmatpush1.msra.mxu0 0.0
        %802 = vmatprep.subr.mxu0 0.0
        %803 = vmatpush1.msra.mxu0 0.0
        %804 = vmatprep.subr.mxu0 0.0
        %805 = vmatpush1.msra.mxu0 0.0
        %806 = vmatprep.mubr.f32.mxu0 0.0
        %807 = vmatmul.mubr.f32.gmra.mrb[0].mxu0 %v591
        %v808 = vpop.f32.mrb[0].mxu0
        %v809 = vadd.f32 %v558, %v808
        %v810 = vpop.f32.mrb[0].mxu0
        %v811 = vadd.f32 %v562, %v810
        %812 = vmatprep.mubr.f32.mxu0 0.0
        %813 = vmatmul.mubr.f32.gmra.mrb[0].mxu0 %v594
        %v814 = vpop.f32.mrb[0].mxu0
        %v815 = vadd.f32 %v558, %v814
        %v816 = vpop.f32.mrb[0].mxu0
        %v817 = vadd.f32 %v562, %v816
        %818 = vmatprep.mubr.f32.mxu0 0.0
        %819 = vmatmul.mubr.f32.gmra.mrb[0].mxu0 %v597
        %v820 = vpop.f32.mrb[0].mxu0
        %v821 = vadd.f32 %v558, %v820
        %v822 = vpop.f32.mrb[0].mxu0
        %v823 = vadd.f32 %v562, %v822
        %824 = vmatprep.mubr.f32.mxu0 0.0
        %825 = vmatmul.mubr.f32.gmra.mrb[0].mxu0 %v600
        %v826 = vpop.f32.mrb[0].mxu0
        %v827 = vadd.f32 %v558, %v826
        %v828 = vpop.f32.mrb[0].mxu0
        %v829 = vadd.f32 %v562, %v828
        %830 = vmatprep.mubr.f32.mxu0 0.0
        %831 = vmatmul.mubr.f32.gmra.mrb[0].mxu0 %v603
        %v832 = vpop.f32.mrb[0].mxu0
        %v833 = vadd.f32 %v558, %v832
        %v834 = vpop.f32.mrb[0].mxu0
        %v835 = vadd.f32 %v562, %v834
        %836 = vmatprep.mubr.f32.mxu0 0.0
        %837 = vmatmul.mubr.f32.gmra.mrb[0].mxu0 %v606
        %v838 = vpop.f32.mrb[0].mxu0
        %v839 = vadd.f32 %v558, %v838
        %v840 = vpop.f32.mrb[0].mxu0
        %v841 = vadd.f32 %v562, %v840
        %842 = vmatprep.mubr.f32.mxu0 0.0
        %843 = vmatmul.mubr.f32.gmra.mrb[0].mxu0 %v609
        %v844 = vpop.f32.mrb[0].mxu0
        %v845 = vadd.f32 %v558, %v844
        %v846 = vpop.f32.mrb[0].mxu0
        %v847 = vadd.f32 %v562, %v846
        %848 = vmatprep.mubr.f32.mxu0 0.0
        %849 = vmatmul.mubr.f32.gmra.mrb[0].mxu0 %v612
        %v850 = vpop.f32.mrb[0].mxu0
        %v851 = vadd.f32 %v558, %v850
        %v852 = vpop.f32.mrb[0].mxu0
        %v853 = vadd.f32 %v562, %v852
        %854 = vdwg.mxu0
        %855 = vmatprep.subr.mxu0 %v625
        %856 = vmatpush1.msra.mxu0 %v623
        %857 = vmatprep.subr.mxu0 0.0
        %858 = vmatpush1.msra.mxu0 0.0
        %859 = vmatprep.subr.mxu0 0.0
        %860 = vmatpush1.msra.mxu0 0.0
        %861 = vmatprep.subr.mxu0 0.0
        %862 = vmatpush1.msra.mxu0 0.0
        %863 = vmatprep.subr.mxu0 0.0
        %864 = vmatpush1.msra.mxu0 0.0
        %865 = vmatprep.subr.mxu0 0.0
        %866 = vmatpush1.msra.mxu0 0.0
        %867 = vmatprep.subr.mxu0 0.0
        %868 = vmatpush1.msra.mxu0 0.0
        %869 = vmatprep.subr.mxu0 0.0
        %870 = vmatpush1.msra.mxu0 0.0
        %871 = vmatprep.subr.mxu0 0.0
        %872 = vmatpush1.msra.mxu0 0.0
        %873 = vmatprep.subr.mxu0 0.0
        %874 = vmatpush1.msra.mxu0 0.0
        %875 = vmatprep.subr.mxu0 0.0
        %876 = vmatpush1.msra.mxu0 0.0
        %877 = vmatprep.subr.mxu0 0.0
        %878 = vmatpush1.msra.mxu0 0.0
        %879 = vmatprep.subr.mxu0 0.0
        %880 = vmatpush1.msra.mxu0 0.0
        %881 = vmatprep.subr.mxu0 0.0
        %882 = vmatpush1.msra.mxu0 0.0
        %883 = vmatprep.subr.mxu0 0.0
        %884 = vmatpush1.msra.mxu0 0.0
        %885 = vmatprep.subr.mxu0 0.0
        %886 = vmatpush1.msra.mxu0 0.0
        %887 = vmatprep.subr.mxu0 0.0
        %888 = vmatpush1.msra.mxu0 0.0
        %889 = vmatprep.subr.mxu0 0.0
        %890 = vmatpush1.msra.mxu0 0.0
        %891 = vmatprep.subr.mxu0 0.0
        %892 = vmatpush1.msra.mxu0 0.0
        %893 = vmatprep.subr.mxu0 0.0
        %894 = vmatpush1.msra.mxu0 0.0
        %895 = vmatprep.subr.mxu0 0.0
        %896 = vmatpush1.msra.mxu0 0.0
        %897 = vmatprep.subr.mxu0 0.0
        %898 = vmatpush1.msra.mxu0 0.0
        %899 = vmatprep.subr.mxu0 0.0
        %900 = vmatpush1.msra.mxu0 0.0
        %901 = vmatprep.subr.mxu0 0.0
        %902 = vmatpush1.msra.mxu0 0.0
        %903 = vmatprep.subr.mxu0 0.0
        %904 = vmatpush1.msra.mxu0 0.0
        %905 = vmatprep.subr.mxu0 0.0
        %906 = vmatpush1.msra.mxu0 0.0
        %907 = vmatprep.subr.mxu0 0.0
        %908 = vmatpush1.msra.mxu0 0.0
        %909 = vmatprep.subr.mxu0 0.0
        %910 = vmatpush1.msra.mxu0 0.0
        %911 = vmatprep.subr.mxu0 0.0
        %912 = vmatpush1.msra.mxu0 0.0
        %913 = vmatprep.subr.mxu0 0.0
        %914 = vmatpush1.msra.mxu0 0.0
        %915 = vmatprep.subr.mxu0 0.0
        %916 = vmatpush1.msra.mxu0 0.0
        %917 = vmatprep.subr.mxu0 0.0
        %918 = vmatpush1.msra.mxu0 0.0
        %919 = vmatprep.mubr.f32.mxu0 0.0
        %920 = vmatmul.mubr.f32.gmra.mrb[0].mxu0 %v591
        %v921 = vpop.f32.mrb[0].mxu0
        %v922 = vadd.f32 %v566, %v921
        %v923 = vpop.f32.mrb[0].mxu0
        %v924 = vadd.f32 %v570, %v923
        %925 = vmatprep.mubr.f32.mxu0 0.0
        %926 = vmatmul.mubr.f32.gmra.mrb[0].mxu0 %v594
        %v927 = vpop.f32.mrb[0].mxu0
        %v928 = vadd.f32 %v566, %v927
        %v929 = vpop.f32.mrb[0].mxu0
        %v930 = vadd.f32 %v570, %v929
        %931 = vmatprep.mubr.f32.mxu0 0.0
        %932 = vmatmul.mubr.f32.gmra.mrb[0].mxu0 %v597
        %v933 = vpop.f32.mrb[0].mxu0
        %v934 = vadd.f32 %v566, %v933
        %v935 = vpop.f32.mrb[0].mxu0
        %v936 = vadd.f32 %v570, %v935
        %937 = vmatprep.mubr.f32.mxu0 0.0
        %938 = vmatmul.mubr.f32.gmra.mrb[0].mxu0 %v600
        %v939 = vpop.f32.mrb[0].mxu0
        %v940 = vadd.f32 %v566, %v939
        %v941 = vpop.f32.mrb[0].mxu0
        %v942 = vadd.f32 %v570, %v941
        %943 = vmatprep.mubr.f32.mxu0 0.0
        %944 = vmatmul.mubr.f32.gmra.mrb[0].mxu0 %v603
        %v945 = vpop.f32.mrb[0].mxu0
        %v946 = vadd.f32 %v566, %v945
        %v947 = vpop.f32.mrb[0].mxu0
        %v948 = vadd.f32 %v570, %v947
        %949 = vmatprep.mubr.f32.mxu0 0.0
        %950 = vmatmul.mubr.f32.gmra.mrb[0].mxu0 %v606
        %v951 = vpop.f32.mrb[0].mxu0
        %v952 = vadd.f32 %v566, %v951
        %v953 = vpop.f32.mrb[0].mxu0
        %v954 = vadd.f32 %v570, %v953
        %955 = vmatprep.mubr.f32.mxu0 0.0
        %956 = vmatmul.mubr.f32.gmra.mrb[0].mxu0 %v609
        %v957 = vpop.f32.mrb[0].mxu0
        %v958 = vadd.f32 %v566, %v957
        %v959 = vpop.f32.mrb[0].mxu0
        %v960 = vadd.f32 %v570, %v959
        %961 = vmatprep.mubr.f32.mxu0 0.0
        %962 = vmatmul.mubr.f32.gmra.mrb[0].mxu0 %v612
        %v963 = vpop.f32.mrb[0].mxu0
        %v964 = vadd.f32 %v566, %v963
        %v965 = vpop.f32.mrb[0].mxu0
        %v966 = vadd.f32 %v570, %v965
        %967 = vdwg.mxu0
        %968 = vmatprep.subr.mxu0 0.0
        %969 = vmatpush1.msra.mxu0 %v627
        %970 = vmatprep.subr.mxu0 0.0
        %971 = vmatpush1.msra.mxu0 0.0
        %972 = vmatprep.subr.mxu0 0.0
        %973 = vmatpush1.msra.mxu0 0.0
        %974 = vmatprep.subr.mxu0 0.0
        %975 = vmatpush1.msra.mxu0 0.0
        %976 = vmatprep.subr.mxu0 0.0
        %977 = vmatpush1.msra.mxu0 0.0
        %978 = vmatprep.subr.mxu0 0.0
        %979 = vmatpush1.msra.mxu0 0.0
        %980 = vmatprep.subr.mxu0 0.0
        %981 = vmatpush1.msra.mxu0 0.0
        %982 = vmatprep.subr.mxu0 0.0
        %983 = vmatpush1.msra.mxu0 0.0
        %984 = vmatprep.subr.mxu0 0.0
        %985 = vmatpush1.msra.mxu0 0.0
        %986 = vmatprep.subr.mxu0 0.0
        %987 = vmatpush1.msra.mxu0 0.0
        %988 = vmatprep.subr.mxu0 0.0
        %989 = vmatpush1.msra.mxu0 0.0
        %990 = vmatprep.subr.mxu0 0.0
        %991 = vmatpush1.msra.mxu0 0.0
        %992 = vmatprep.subr.mxu0 0.0
        %993 = vmatpush1.msra.mxu0 0.0
        %994 = vmatprep.subr.mxu0 0.0
        %995 = vmatpush1.msra.mxu0 0.0
        %996 = vmatprep.subr.mxu0 0.0
        %997 = vmatpush1.msra.mxu0 0.0
        %998 = vmatprep.subr.mxu0 0.0
        %999 = vmatpush1.msra.mxu0 0.0
        %1000 = vmatprep.subr.mxu0 0.0
        %1001 = vmatpush1.msra.mxu0 0.0
        %1002 = vmatprep.subr.mxu0 0.0
        %1003 = vmatpush1.msra.mxu0 0.0
        %1004 = vmatprep.subr.mxu0 0.0
        %1005 = vmatpush1.msra.mxu0 0.0
        %1006 = vmatprep.subr.mxu0 0.0
        %1007 = vmatpush1.msra.mxu0 0.0
        %1008 = vmatprep.subr.mxu0 0.0
        %1009 = vmatpush1.msra.mxu0 0.0
        %1010 = vmatprep.subr.mxu0 0.0
        %1011 = vmatpush1.msra.mxu0 0.0
        %1012 = vmatprep.subr.mxu0 0.0
        %1013 = vmatpush1.msra.mxu0 0.0
        %1014 = vmatprep.subr.mxu0 0.0
        %1015 = vmatpush1.msra.mxu0 0.0
        %1016 = vmatprep.subr.mxu0 0.0
        %1017 = vmatpush1.msra.mxu0 0.0
        %1018 = vmatprep.subr.mxu0 0.0
        %1019 = vmatpush1.msra.mxu0 0.0
        %1020 = vmatprep.subr.mxu0 0.0
        %1021 = vmatpush1.msra.mxu0 0.0
        %1022 = vmatprep.subr.mxu0 0.0
        %1023 = vmatpush1.msra.mxu0 0.0
        %1024 = vmatprep.subr.mxu0 0.0
        %1025 = vmatpush1.msra.mxu0 0.0
        %1026 = vmatprep.subr.mxu0 0.0
        %1027 = vmatpush1.msra.mxu0 0.0
        %1028 = vmatprep.subr.mxu0 0.0
        %1029 = vmatpush1.msra.mxu0 0.0
        %1030 = vmatprep.subr.mxu0 0.0
        %1031 = vmatpush1.msra.mxu0 0.0
        %1032 = vmatprep.mubr.f32.mxu0 0.0
        %1033 = vmatmul.mubr.f32.gmra.mrb[0].mxu0 %v591
        %v1034 = vpop.f32.mrb[0].mxu0
        %v1035 = vadd.f32 %v574, %v1034
        %v1036 = vpop.f32.mrb[0].mxu0
        %1037 = vmatprep.mubr.f32.mxu0 0.0
        %1038 = vmatmul.mubr.f32.gmra.mrb[0].mxu0 %v594
        %v1039 = vpop.f32.mrb[0].mxu0
        %v1040 = vadd.f32 %v574, %v1039
        %v1041 = vpop.f32.mrb[0].mxu0
        %1042 = vmatprep.mubr.f32.mxu0 0.0
        %1043 = vmatmul.mubr.f32.gmra.mrb[0].mxu0 %v597
        %v1044 = vpop.f32.mrb[0].mxu0
        %v1045 = vadd.f32 %v574, %v1044
        %v1046 = vpop.f32.mrb[0].mxu0
        %1047 = vmatprep.mubr.f32.mxu0 0.0
        %1048 = vmatmul.mubr.f32.gmra.mrb[0].mxu0 %v600
        %v1049 = vpop.f32.mrb[0].mxu0
        %v1050 = vadd.f32 %v574, %v1049
        %v1051 = vpop.f32.mrb[0].mxu0
        %1052 = vmatprep.mubr.f32.mxu0 0.0
        %1053 = vmatmul.mubr.f32.gmra.mrb[0].mxu0 %v603
        %v1054 = vpop.f32.mrb[0].mxu0
        %v1055 = vadd.f32 %v574, %v1054
        %v1056 = vpop.f32.mrb[0].mxu0
        %1057 = vmatprep.mubr.f32.mxu0 0.0
        %1058 = vmatmul.mubr.f32.gmra.mrb[0].mxu0 %v606
        %v1059 = vpop.f32.mrb[0].mxu0
        %v1060 = vadd.f32 %v574, %v1059
        %v1061 = vpop.f32.mrb[0].mxu0
        %1062 = vmatprep.mubr.f32.mxu0 0.0
        %1063 = vmatmul.mubr.f32.gmra.mrb[0].mxu0 %v609
        %v1064 = vpop.f32.mrb[0].mxu0
        %v1065 = vadd.f32 %v574, %v1064
        %v1066 = vpop.f32.mrb[0].mxu0
        %1067 = vmatprep.mubr.f32.mxu0 0.0
        %1068 = vmatmul.mubr.f32.gmra.mrb[0].mxu0 %v612
        %v1069 = vpop.f32.mrb[0].mxu0
        %v1070 = vadd.f32 %v574, %v1069
        %v1071 = vpop.f32.mrb[0].mxu0
        %1072 = vdwg.mxu0
        %v1073 = vmax.f32 %v696, 0.0
        %v1074 = vmax.f32 %v702, 0.0
        %v1075 = vmax.f32 %v708, 0.0
        %v1076 = vmax.f32 %v714, 0.0
        %v1077 = vmax.f32 %v720, 0.0
        %v1078 = vmax.f32 %v726, 0.0
        %v1079 = vmax.f32 %v732, 0.0
        %v1080 = vmax.f32 %v738, 0.0
        %v1081 = vmax.f32 %v1073, %v698
        %v1082 = vmax.f32 %v1074, %v704
        %v1083 = vmax.f32 %v1075, %v710
        %v1084 = vmax.f32 %v1076, %v716
        %v1085 = vmax.f32 %v1077, %v722
        %v1086 = vmax.f32 %v1078, %v728
        %v1087 = vmax.f32 %v1079, %v734
        %v1088 = vmax.f32 %v1080, %v740
        %v1089 = vmax.f32 %v1081, %v809
        %v1090 = vmax.f32 %v1082, %v815
        %v1091 = vmax.f32 %v1083, %v821
        %v1092 = vmax.f32 %v1084, %v827
        %v1093 = vmax.f32 %v1085, %v833
        %v1094 = vmax.f32 %v1086, %v839
        %v1095 = vmax.f32 %v1087, %v845
        %v1096 = vmax.f32 %v1088, %v851
        %v1097 = vmax.f32 %v1089, %v811
        %v1098 = vmax.f32 %v1090, %v817
        %v1099 = vmax.f32 %v1091, %v823
        %v1100 = vmax.f32 %v1092, %v829
        %v1101 = vmax.f32 %v1093, %v835
        %v1102 = vmax.f32 %v1094, %v841
        %v1103 = vmax.f32 %v1095, %v847
        %v1104 = vmax.f32 %v1096, %v853
        %v1105 = vmax.f32 %v1097, %v922
        %v1106 = vmax.f32 %v1098, %v928
        %v1107 = vmax.f32 %v1099, %v934
        %v1108 = vmax.f32 %v1100, %v940
        %v1109 = vmax.f32 %v1101, %v946
        %v1110 = vmax.f32 %v1102, %v952
        %v1111 = vmax.f32 %v1103, %v958
        %v1112 = vmax.f32 %v1104, %v964
        %v1113 = vmax.f32 %v1105, %v924
        %v1114 = vmax.f32 %v1106, %v930
        %v1115 = vmax.f32 %v1107, %v936
        %v1116 = vmax.f32 %v1108, %v942
        %v1117 = vmax.f32 %v1109, %v948
        %v1118 = vmax.f32 %v1110, %v954
        %v1119 = vmax.f32 %v1111, %v960
        %v1120 = vmax.f32 %v1112, %v966
        %v1121 = vmax.f32 %v1113, %v1035
        %v1122 = vmax.f32 %v1114, %v1040
        %v1123 = vmax.f32 %v1115, %v1045
        %v1124 = vmax.f32 %v1116, %v1050
        %v1125 = vmax.f32 %v1117, %v1055
        %v1126 = vmax.f32 %v1118, %v1060
        %v1127 = vmax.f32 %v1119, %v1065
        %v1128 = vmax.f32 %v1120, %v1070
        %v1129 = vsub.f32 0.0, %v1121
        %v1130 = vsub.f32 0.0, %v1122
        %v1131 = vsub.f32 0.0, %v1123
        %v1132 = vsub.f32 0.0, %v1124
        %v1133 = vsub.f32 0.0, %v1125
        %v1134 = vsub.f32 0.0, %v1126
        %v1135 = vsub.f32 0.0, %v1127
        %v1136 = vsub.f32 0.0, %v1128
        %v1137 = vmul.f32 %v1129, 1.442695
        %v1138 = vpow.pop %v1137
        %v1139 = vmul.f32 %v1130, 1.442695
        %v1140 = vpow.pop %v1139
        %v1141 = vmul.f32 %v1131, 1.442695
        %v1142 = vpow.pop %v1141
        %v1143 = vmul.f32 %v1132, 1.442695
        %v1144 = vpow.pop %v1143
        %v1145 = vmul.f32 %v1133, 1.442695
        %v1146 = vpow.pop %v1145
        %v1147 = vmul.f32 %v1134, 1.442695
        %v1148 = vpow.pop %v1147
        %v1149 = vmul.f32 %v1135, 1.442695
        %v1150 = vpow.pop %v1149
        %v1151 = vmul.f32 %v1136, 1.442695
        %v1152 = vpow.pop %v1151
        %v1153 = vsub.f32 %v696, %v1121
        %v1154 = vsub.f32 %v702, %v1122
        %v1155 = vsub.f32 %v708, %v1123
        %v1156 = vsub.f32 %v714, %v1124
        %v1157 = vsub.f32 %v720, %v1125
        %v1158 = vsub.f32 %v726, %v1126
        %v1159 = vsub.f32 %v732, %v1127
        %v1160 = vsub.f32 %v738, %v1128
        %v1161 = vmul.f32 %v1153, 1.442695
        %v1162 = vpow.pop %v1161
        %v1163 = vmul.f32 %v1154, 1.442695
        %v1164 = vpow.pop %v1163
        %v1165 = vmul.f32 %v1155, 1.442695
        %v1166 = vpow.pop %v1165
        %v1167 = vmul.f32 %v1156, 1.442695
        %v1168 = vpow.pop %v1167
        %v1169 = vmul.f32 %v1157, 1.442695
        %v1170 = vpow.pop %v1169
        %v1171 = vmul.f32 %v1158, 1.442695
        %v1172 = vpow.pop %v1171
        %v1173 = vmul.f32 %v1159, 1.442695
        %v1174 = vpow.pop %v1173
        %v1175 = vmul.f32 %v1160, 1.442695
        %v1176 = vpow.pop %v1175
        %v1177 = vadd.f32 %v1138, %v1162
        %v1178 = vadd.f32 %v1140, %v1164
        %v1179 = vadd.f32 %v1142, %v1166
        %v1180 = vadd.f32 %v1144, %v1168
        %v1181 = vadd.f32 %v1146, %v1170
        %v1182 = vadd.f32 %v1148, %v1172
        %v1183 = vadd.f32 %v1150, %v1174
        %v1184 = vadd.f32 %v1152, %v1176
        %v1185 = vmul.f32 %v474, %v696
        %v1186 = vmul.f32 %v481, %v702
        %v1187 = vmul.f32 %v488, %v708
        %v1188 = vmul.f32 %v495, %v714
        %v1189 = vmul.f32 %v502, %v720
        %v1190 = vmul.f32 %v509, %v726
        %v1191 = vmul.f32 %v516, %v732
        %v1192 = vmul.f32 %v523, %v738
        %v1193 = vadd.f32 %v1185, 0.0
        %v1194 = vadd.f32 %v1186, 0.0
        %v1195 = vadd.f32 %v1187, 0.0
        %v1196 = vadd.f32 %v1188, 0.0
        %v1197 = vadd.f32 %v1189, 0.0
        %v1198 = vadd.f32 %v1190, 0.0
        %v1199 = vadd.f32 %v1191, 0.0
        %v1200 = vadd.f32 %v1192, 0.0
        %v1201 = vsub.f32 %v698, %v1121
        %v1202 = vsub.f32 %v704, %v1122
        %v1203 = vsub.f32 %v710, %v1123
        %v1204 = vsub.f32 %v716, %v1124
        %v1205 = vsub.f32 %v722, %v1125
        %v1206 = vsub.f32 %v728, %v1126
        %v1207 = vsub.f32 %v734, %v1127
        %v1208 = vsub.f32 %v740, %v1128
        %v1209 = vmul.f32 %v1201, 1.442695
        %v1210 = vpow.pop %v1209
        %v1211 = vmul.f32 %v1202, 1.442695
        %v1212 = vpow.pop %v1211
        %v1213 = vmul.f32 %v1203, 1.442695
        %v1214 = vpow.pop %v1213
        %v1215 = vmul.f32 %v1204, 1.442695
        %v1216 = vpow.pop %v1215
        %v1217 = vmul.f32 %v1205, 1.442695
        %v1218 = vpow.pop %v1217
        %v1219 = vmul.f32 %v1206, 1.442695
        %v1220 = vpow.pop %v1219
        %v1221 = vmul.f32 %v1207, 1.442695
        %v1222 = vpow.pop %v1221
        %v1223 = vmul.f32 %v1208, 1.442695
        %v1224 = vpow.pop %v1223
        %v1225 = vadd.f32 %v1177, %v1210
        %v1226 = vadd.f32 %v1178, %v1212
        %v1227 = vadd.f32 %v1179, %v1214
        %v1228 = vadd.f32 %v1180, %v1216
        %v1229 = vadd.f32 %v1181, %v1218
        %v1230 = vadd.f32 %v1182, %v1220
        %v1231 = vadd.f32 %v1183, %v1222
        %v1232 = vadd.f32 %v1184, %v1224
        %v1233 = vmul.f32 %v475, %v698
        %v1234 = vmul.f32 %v482, %v704
        %v1235 = vmul.f32 %v489, %v710
        %v1236 = vmul.f32 %v496, %v716
        %v1237 = vmul.f32 %v503, %v722
        %v1238 = vmul.f32 %v510, %v728
        %v1239 = vmul.f32 %v517, %v734
        %v1240 = vmul.f32 %v524, %v740
        %v1241 = vadd.f32 %v1193, %v1233
        %v1242 = vadd.f32 %v1194, %v1234
        %v1243 = vadd.f32 %v1195, %v1235
        %v1244 = vadd.f32 %v1196, %v1236
        %v1245 = vadd.f32 %v1197, %v1237
        %v1246 = vadd.f32 %v1198, %v1238
        %v1247 = vadd.f32 %v1199, %v1239
        %v1248 = vadd.f32 %v1200, %v1240
        %v1249 = vsub.f32 %v809, %v1121
        %v1250 = vsub.f32 %v815, %v1122
        %v1251 = vsub.f32 %v821, %v1123
        %v1252 = vsub.f32 %v827, %v1124
        %v1253 = vsub.f32 %v833, %v1125
        %v1254 = vsub.f32 %v839, %v1126
        %v1255 = vsub.f32 %v845, %v1127
        %v1256 = vsub.f32 %v851, %v1128
        %v1257 = vmul.f32 %v1249, 1.442695
        %v1258 = vpow.pop %v1257
        %v1259 = vmul.f32 %v1250, 1.442695
        %v1260 = vpow.pop %v1259
        %v1261 = vmul.f32 %v1251, 1.442695
        %v1262 = vpow.pop %v1261
        %v1263 = vmul.f32 %v1252, 1.442695
        %v1264 = vpow.pop %v1263
        %v1265 = vmul.f32 %v1253, 1.442695
        %v1266 = vpow.pop %v1265
        %v1267 = vmul.f32 %v1254, 1.442695
        %v1268 = vpow.pop %v1267
        %v1269 = vmul.f32 %v1255, 1.442695
        %v1270 = vpow.pop %v1269
        %v1271 = vmul.f32 %v1256, 1.442695
        %v1272 = vpow.pop %v1271
        %v1273 = vadd.f32 %v1225, %v1258
        %v1274 = vadd.f32 %v1226, %v1260
        %v1275 = vadd.f32 %v1227, %v1262
        %v1276 = vadd.f32 %v1228, %v1264
        %v1277 = vadd.f32 %v1229, %v1266
        %v1278 = vadd.f32 %v1230, %v1268
        %v1279 = vadd.f32 %v1231, %v1270
        %v1280 = vadd.f32 %v1232, %v1272
        %v1281 = vmul.f32 %v476, %v809
        %v1282 = vmul.f32 %v483, %v815
        %v1283 = vmul.f32 %v490, %v821
        %v1284 = vmul.f32 %v497, %v827
        %v1285 = vmul.f32 %v504, %v833
        %v1286 = vmul.f32 %v511, %v839
        %v1287 = vmul.f32 %v518, %v845
        %v1288 = vmul.f32 %v525, %v851
        %v1289 = vadd.f32 %v1241, %v1281
        %v1290 = vadd.f32 %v1242, %v1282
        %v1291 = vadd.f32 %v1243, %v1283
        %v1292 = vadd.f32 %v1244, %v1284
        %v1293 = vadd.f32 %v1245, %v1285
        %v1294 = vadd.f32 %v1246, %v1286
        %v1295 = vadd.f32 %v1247, %v1287
        %v1296 = vadd.f32 %v1248, %v1288
        %v1297 = vsub.f32 %v811, %v1121
        %v1298 = vsub.f32 %v817, %v1122
        %v1299 = vsub.f32 %v823, %v1123
        %v1300 = vsub.f32 %v829, %v1124
        %v1301 = vsub.f32 %v835, %v1125
        %v1302 = vsub.f32 %v841, %v1126
        %v1303 = vsub.f32 %v847, %v1127
        %v1304 = vsub.f32 %v853, %v1128
        %v1305 = vmul.f32 %v1297, 1.442695
        %v1306 = vpow.pop %v1305
        %v1307 = vmul.f32 %v1298, 1.442695
        %v1308 = vpow.pop %v1307
        %v1309 = vmul.f32 %v1299, 1.442695
        %v1310 = vpow.pop %v1309
        %v1311 = vmul.f32 %v1300, 1.442695
        %v1312 = vpow.pop %v1311
        %v1313 = vmul.f32 %v1301, 1.442695
        %v1314 = vpow.pop %v1313
        %v1315 = vmul.f32 %v1302, 1.442695
        %v1316 = vpow.pop %v1315
        %v1317 = vmul.f32 %v1303, 1.442695
        %v1318 = vpow.pop %v1317
        %v1319 = vmul.f32 %v1304, 1.442695
        %v1320 = vpow.pop %v1319
        %v1321 = vadd.f32 %v1273, %v1306
        %v1322 = vadd.f32 %v1274, %v1308
        %v1323 = vadd.f32 %v1275, %v1310
        %v1324 = vadd.f32 %v1276, %v1312
        %v1325 = vadd.f32 %v1277, %v1314
        %v1326 = vadd.f32 %v1278, %v1316
        %v1327 = vadd.f32 %v1279, %v1318
        %v1328 = vadd.f32 %v1280, %v1320
        %v1329 = vmul.f32 %v477, %v811
        %v1330 = vmul.f32 %v484, %v817
        %v1331 = vmul.f32 %v491, %v823
        %v1332 = vmul.f32 %v498, %v829
        %v1333 = vmul.f32 %v505, %v835
        %v1334 = vmul.f32 %v512, %v841
        %v1335 = vmul.f32 %v519, %v847
        %v1336 = vmul.f32 %v526, %v853
        %v1337 = vadd.f32 %v1289, %v1329
        %v1338 = vadd.f32 %v1290, %v1330
        %v1339 = vadd.f32 %v1291, %v1331
        %v1340 = vadd.f32 %v1292, %v1332
        %v1341 = vadd.f32 %v1293, %v1333
        %v1342 = vadd.f32 %v1294, %v1334
        %v1343 = vadd.f32 %v1295, %v1335
        %v1344 = vadd.f32 %v1296, %v1336
        %v1345 = vsub.f32 %v922, %v1121
        %v1346 = vsub.f32 %v928, %v1122
        %v1347 = vsub.f32 %v934, %v1123
        %v1348 = vsub.f32 %v940, %v1124
        %v1349 = vsub.f32 %v946, %v1125
        %v1350 = vsub.f32 %v952, %v1126
        %v1351 = vsub.f32 %v958, %v1127
        %v1352 = vsub.f32 %v964, %v1128
        %v1353 = vmul.f32 %v1345, 1.442695
        %v1354 = vpow.pop %v1353
        %v1355 = vmul.f32 %v1346, 1.442695
        %v1356 = vpow.pop %v1355
        %v1357 = vmul.f32 %v1347, 1.442695
        %v1358 = vpow.pop %v1357
        %v1359 = vmul.f32 %v1348, 1.442695
        %v1360 = vpow.pop %v1359
        %v1361 = vmul.f32 %v1349, 1.442695
        %v1362 = vpow.pop %v1361
        %v1363 = vmul.f32 %v1350, 1.442695
        %v1364 = vpow.pop %v1363
        %v1365 = vmul.f32 %v1351, 1.442695
        %v1366 = vpow.pop %v1365
        %v1367 = vmul.f32 %v1352, 1.442695
        %v1368 = vpow.pop %v1367
        %v1369 = vadd.f32 %v1321, %v1354
        %v1370 = vadd.f32 %v1322, %v1356
        %v1371 = vadd.f32 %v1323, %v1358
        %v1372 = vadd.f32 %v1324, %v1360
        %v1373 = vadd.f32 %v1325, %v1362
        %v1374 = vadd.f32 %v1326, %v1364
        %v1375 = vadd.f32 %v1327, %v1366
        %v1376 = vadd.f32 %v1328, %v1368
        %v1377 = vmul.f32 %v478, %v922
        %v1378 = vmul.f32 %v485, %v928
        %v1379 = vmul.f32 %v492, %v934
        %v1380 = vmul.f32 %v499, %v940
        %v1381 = vmul.f32 %v506, %v946
        %v1382 = vmul.f32 %v513, %v952
        %v1383 = vmul.f32 %v520, %v958
        %v1384 = vmul.f32 %v527, %v964
        %v1385 = vadd.f32 %v1337, %v1377
        %v1386 = vadd.f32 %v1338, %v1378
        %v1387 = vadd.f32 %v1339, %v1379
        %v1388 = vadd.f32 %v1340, %v1380
        %v1389 = vadd.f32 %v1341, %v1381
        %v1390 = vadd.f32 %v1342, %v1382
        %v1391 = vadd.f32 %v1343, %v1383
        %v1392 = vadd.f32 %v1344, %v1384
        %v1393 = vsub.f32 %v924, %v1121
        %v1394 = vsub.f32 %v930, %v1122
        %v1395 = vsub.f32 %v936, %v1123
        %v1396 = vsub.f32 %v942, %v1124
        %v1397 = vsub.f32 %v948, %v1125
        %v1398 = vsub.f32 %v954, %v1126
        %v1399 = vsub.f32 %v960, %v1127
        %v1400 = vsub.f32 %v966, %v1128
        %v1401 = vmul.f32 %v1393, 1.442695
        %v1402 = vpow.pop %v1401
        %v1403 = vmul.f32 %v1394, 1.442695
        %v1404 = vpow.pop %v1403
        %v1405 = vmul.f32 %v1395, 1.442695
        %v1406 = vpow.pop %v1405
        %v1407 = vmul.f32 %v1396, 1.442695
        %v1408 = vpow.pop %v1407
        %v1409 = vmul.f32 %v1397, 1.442695
        %v1410 = vpow.pop %v1409
        %v1411 = vmul.f32 %v1398, 1.442695
        %v1412 = vpow.pop %v1411
        %v1413 = vmul.f32 %v1399, 1.442695
        %v1414 = vpow.pop %v1413
        %v1415 = vmul.f32 %v1400, 1.442695
        %v1416 = vpow.pop %v1415
        %v1417 = vadd.f32 %v1369, %v1402
        %v1418 = vadd.f32 %v1370, %v1404
        %v1419 = vadd.f32 %v1371, %v1406
        %v1420 = vadd.f32 %v1372, %v1408
        %v1421 = vadd.f32 %v1373, %v1410
        %v1422 = vadd.f32 %v1374, %v1412
        %v1423 = vadd.f32 %v1375, %v1414
        %v1424 = vadd.f32 %v1376, %v1416
        %v1425 = vmul.f32 %v479, %v924
        %v1426 = vmul.f32 %v486, %v930
        %v1427 = vmul.f32 %v493, %v936
        %v1428 = vmul.f32 %v500, %v942
        %v1429 = vmul.f32 %v507, %v948
        %v1430 = vmul.f32 %v514, %v954
        %v1431 = vmul.f32 %v521, %v960
        %v1432 = vmul.f32 %v528, %v966
        %v1433 = vadd.f32 %v1385, %v1425
        %v1434 = vadd.f32 %v1386, %v1426
        %v1435 = vadd.f32 %v1387, %v1427
        %v1436 = vadd.f32 %v1388, %v1428
        %v1437 = vadd.f32 %v1389, %v1429
        %v1438 = vadd.f32 %v1390, %v1430
        %v1439 = vadd.f32 %v1391, %v1431
        %v1440 = vadd.f32 %v1392, %v1432
        %v1441 = vsub.f32 %v1035, %v1121
        %v1442 = vsub.f32 %v1040, %v1122
        %v1443 = vsub.f32 %v1045, %v1123
        %v1444 = vsub.f32 %v1050, %v1124
        %v1445 = vsub.f32 %v1055, %v1125
        %v1446 = vsub.f32 %v1060, %v1126
        %v1447 = vsub.f32 %v1065, %v1127
        %v1448 = vsub.f32 %v1070, %v1128
        %v1449 = vmul.f32 %v1441, 1.442695
        %v1450 = vpow.pop %v1449
        %v1451 = vmul.f32 %v1442, 1.442695
        %v1452 = vpow.pop %v1451
        %v1453 = vmul.f32 %v1443, 1.442695
        %v1454 = vpow.pop %v1453
        %v1455 = vmul.f32 %v1444, 1.442695
        %v1456 = vpow.pop %v1455
        %v1457 = vmul.f32 %v1445, 1.442695
        %v1458 = vpow.pop %v1457
        %v1459 = vmul.f32 %v1446, 1.442695
        %v1460 = vpow.pop %v1459
        %v1461 = vmul.f32 %v1447, 1.442695
        %v1462 = vpow.pop %v1461
        %v1463 = vmul.f32 %v1448, 1.442695
        %v1464 = vpow.pop %v1463
        %v1465 = vadd.f32 %v1417, %v1450
        %v1466 = vadd.f32 %v1418, %v1452
        %v1467 = vadd.f32 %v1419, %v1454
        %v1468 = vadd.f32 %v1420, %v1456
        %v1469 = vadd.f32 %v1421, %v1458
        %v1470 = vadd.f32 %v1422, %v1460
        %v1471 = vadd.f32 %v1423, %v1462
        %v1472 = vadd.f32 %v1424, %v1464
        %v1473 = vmul.f32 %v480, %v1035
        %v1474 = vmul.f32 %v487, %v1040
        %v1475 = vmul.f32 %v494, %v1045
        %v1476 = vmul.f32 %v501, %v1050
        %v1477 = vmul.f32 %v508, %v1055
        %v1478 = vmul.f32 %v515, %v1060
        %v1479 = vmul.f32 %v522, %v1065
        %v1480 = vmul.f32 %v529, %v1070
        %v1481 = vadd.f32 %v1433, %v1473
        %v1482 = vadd.f32 %v1434, %v1474
        %v1483 = vadd.f32 %v1435, %v1475
        %v1484 = vadd.f32 %v1436, %v1476
        %v1485 = vadd.f32 %v1437, %v1477
        %v1486 = vadd.f32 %v1438, %v1478
        %v1487 = vadd.f32 %v1439, %v1479
        %v1488 = vadd.f32 %v1440, %v1480
        %v1489 = vlog2.pop %v1465
        %v1490 = vmul.f32 %v1489, 0.6931472
        %v1491 = vlog2.pop %v1466
        %v1492 = vmul.f32 %v1491, 0.6931472
        %v1493 = vlog2.pop %v1467
        %v1494 = vmul.f32 %v1493, 0.6931472
        %v1495 = vlog2.pop %v1468
        %v1496 = vmul.f32 %v1495, 0.6931472
        %v1497 = vlog2.pop %v1469
        %v1498 = vmul.f32 %v1497, 0.6931472
        %v1499 = vlog2.pop %v1470
        %v1500 = vmul.f32 %v1499, 0.6931472
        %v1501 = vlog2.pop %v1471
        %v1502 = vmul.f32 %v1501, 0.6931472
        %v1503 = vlog2.pop %v1472
        %v1504 = vmul.f32 %v1503, 0.6931472
        %v1505 = vadd.f32 %v1121, %v1490
        %v1506 = vadd.f32 %v1122, %v1492
        %v1507 = vadd.f32 %v1123, %v1494
        %v1508 = vadd.f32 %v1124, %v1496
        %v1509 = vadd.f32 %v1125, %v1498
        %v1510 = vadd.f32 %v1126, %v1500
        %v1511 = vadd.f32 %v1127, %v1502
        %v1512 = vadd.f32 %v1128, %v1504
        %v1513 = vmul.f32 %v538, %v1505
        %v1514 = vmul.f32 %v539, %v1506
        %v1515 = vmul.f32 %v540, %v1507
        %v1516 = vmul.f32 %v541, %v1508
        %v1517 = vmul.f32 %v542, %v1509
        %v1518 = vmul.f32 %v543, %v1510
        %v1519 = vmul.f32 %v544, %v1511
        %v1520 = vmul.f32 %v545, %v1512
        %v1521 = vsub.f32 %v1481, %v1513
        %v1522 = vsub.f32 %v1482, %v1514
        %v1523 = vsub.f32 %v1483, %v1515
        %v1524 = vsub.f32 %v1484, %v1516
        %v1525 = vsub.f32 %v1485, %v1517
        %v1526 = vsub.f32 %v1486, %v1518
        %v1527 = vsub.f32 %v1487, %v1519
        %v1528 = vsub.f32 %v1488, %v1520
        %vm1529 = vcmask 523264
        %v1531 = vsel %vm1529, 1.0, 0
        %1533 = vmatprep.subr.mxu0 0.0
        %1534 = vmatpush1.msra.mxu0 %v1521
        %1535 = vmatprep.subr.mxu0 0.0
        %1536 = vmatpush1.msra.mxu0 %v1522
        %1537 = vmatprep.subr.mxu0 0.0
        %1538 = vmatpush1.msra.mxu0 %v1523
        %1539 = vmatprep.subr.mxu0 0.0
        %1540 = vmatpush1.msra.mxu0 %v1524
        %1541 = vmatprep.subr.mxu0 0.0
        %1542 = vmatpush1.msra.mxu0 %v1525
        %1543 = vmatprep.subr.mxu0 0.0
        %1544 = vmatpush1.msra.mxu0 %v1526
        %1545 = vmatprep.subr.mxu0 0.0
        %1546 = vmatpush1.msra.mxu0 %v1527
        %1547 = vmatprep.subr.mxu0 0.0
        %1548 = vmatpush1.msra.mxu0 %v1528
        %1549 = vmatprep.subr.mxu0 0.0
        %1550 = vmatpush1.msra.mxu0 0.0
        %1551 = vmatprep.subr.mxu0 0.0
        %1552 = vmatpush1.msra.mxu0 0.0
        %1553 = vmatprep.subr.mxu0 0.0
        %1554 = vmatpush1.msra.mxu0 0.0
        %1555 = vmatprep.subr.mxu0 0.0
        %1556 = vmatpush1.msra.mxu0 0.0
        %1557 = vmatprep.subr.mxu0 0.0
        %1558 = vmatpush1.msra.mxu0 0.0
        %1559 = vmatprep.subr.mxu0 0.0
        %1560 = vmatpush1.msra.mxu0 0.0
        %1561 = vmatprep.subr.mxu0 0.0
        %1562 = vmatpush1.msra.mxu0 0.0
        %1563 = vmatprep.subr.mxu0 0.0
        %1564 = vmatpush1.msra.mxu0 0.0
        %1565 = vmatprep.subr.mxu0 0.0
        %1566 = vmatpush1.msra.mxu0 0.0
        %1567 = vmatprep.subr.mxu0 0.0
        %1568 = vmatpush1.msra.mxu0 0.0
        %1569 = vmatprep.subr.mxu0 0.0
        %1570 = vmatpush1.msra.mxu0 0.0
        %1571 = vmatprep.subr.mxu0 0.0
        %1572 = vmatpush1.msra.mxu0 0.0
        %1573 = vmatprep.subr.mxu0 0.0
        %1574 = vmatpush1.msra.mxu0 0.0
        %1575 = vmatprep.subr.mxu0 0.0
        %1576 = vmatpush1.msra.mxu0 0.0
        %1577 = vmatprep.subr.mxu0 0.0
        %1578 = vmatpush1.msra.mxu0 0.0
        %1579 = vmatprep.subr.mxu0 0.0
        %1580 = vmatpush1.msra.mxu0 0.0
        %1581 = vmatprep.subr.mxu0 0.0
        %1582 = vmatpush1.msra.mxu0 0.0
        %1583 = vmatprep.subr.mxu0 0.0
        %1584 = vmatpush1.msra.mxu0 0.0
        %1585 = vmatprep.subr.mxu0 0.0
        %1586 = vmatpush1.msra.mxu0 0.0
        %1587 = vmatprep.subr.mxu0 0.0
        %1588 = vmatpush1.msra.mxu0 0.0
        %1589 = vmatprep.subr.mxu0 0.0
        %1590 = vmatpush1.msra.mxu0 0.0
        %1591 = vmatprep.subr.mxu0 0.0
        %1592 = vmatpush1.msra.mxu0 0.0
        %1593 = vmatprep.subr.mxu0 0.0
        %1594 = vmatpush1.msra.mxu0 0.0
        %1595 = vmatprep.subr.mxu0 0.0
        %1596 = vmatpush1.msra.mxu0 0.0
        %1597 = vmatprep.mubr.f32.mxu0 0.0
        %1598 = vmatmul.mubr.f32.gmra.mrb[0].mxu0 %v1531
        %v1599 = vpop.f32.mrb[0].mxu0
        %v1600 = vadd.f32 0.0, %v1599
        %v1601 = vpop.f32.mrb[0].mxu0
        %1602 = vdwg.mxu0
        %v1603 = vld [vmem:[%s391] sm:$0x1]
        %v1604 = vadd.f32 %v1603, %v1600
        %1605 = vst [vmem:[%s391] sm:$0x1] %v1604
        %s1606 = sand.u32 %s182, 1
        %s1607 = scalar_lea.sflag [#allocation4], %s1606
        %s1608 = sand.u32 %s182, 1
        %s1609 = scalar_lea.vmem [#allocation10], %s1608
        // Predicated region
        $region61: #{tpu_custom_call.1} parent=39 // pred_check
          %p1610 = pneg %p192
        $region62: #{tpu_custom_call.1} parent=39 // pred_check_branch
          %1612 = sbr.rel (%p1610) target = $region64
        $region63: #{tpu_custom_call.1} parent=39 // pred_region
          %s1614 = ssub.s32 16, 16
          %1615 = vsyncadd %s1607, %s1614
          %s1616 = smul.addr %s32, 16
          %s1617 = scalar_lea.hbm %s5, %s1616
          %s1619 = sshll.u32 %s1609, 4
          %s1620 = int_to_ptr.vmem [resolvable:$true] %s1619
          %1622 = dma.vmem_to_hbm [thread:$0]  %s1620, 16, %s1617, %s1607
        $region64: #{tpu_custom_call.1} parent=39 // pred_fallthru
          _
      $region40: #{tpu_custom_call.1} parent=5 // pred_fallthru
        _
      %p1623 = scmp.le.s32.totalorder 2, %s23
      // Predicated region
      $region65: #{tpu_custom_call.1} parent=5 // pred_check
        %p1624 = pneg %p1623
      $region66: #{tpu_custom_call.1} parent=5 // pred_check_branch
        %1626 = sbr.rel (%p1624) target = $region68
      $region67: #{tpu_custom_call.1} parent=5 // pred_region
        %s1627 = ssub.s32 %s23, 2
        // Predicated region
        $region69: #{tpu_custom_call.1} parent=67 // pred_check
          %p1628 = pneg %p198
        $region70: #{tpu_custom_call.1} parent=67 // pred_check_branch
          %1630 = sbr.rel (%p1628) target = $region72
        $region71: #{tpu_custom_call.1} parent=67 // pred_region
          %s1631 = sand.u32 %s183, 1
          %s1632 = scalar_lea.sflag [#allocation4], %s1631
          %s1633 = sand.u32 %s183, 1
          %s1634 = scalar_lea.vmem [#allocation10], %s1633
          %1635 = dma.done %s1632, 16
        $region72: #{tpu_custom_call.1} parent=67 // pred_fallthru
          _
      $region68: #{tpu_custom_call.1} parent=5 // pred_fallthru
        _
    $region6: #{tpu_custom_call.1} parent=1 // loop_footer
      %s27 = sadd.s32 1, %s23
    $region7: #{tpu_custom_call.1} parent=1 // loop_footer_branch
      %22 = sbr.rel target = $region3
    $region8: #{tpu_custom_call.1} parent=1 // loop_exit
      _
    %1636 = vsyncpa [#allocation3], 1
    %s1637 = scalar_lea.sflag [#allocation3], 1
    %1638 = vsyncpa %s1637, 1
    %1639 = vsyncpa [#allocation6], 1
    %s1640 = scalar_lea.sflag [#allocation6], 1
    %1641 = vsyncpa %s1640, 1
    %1642 = vsyncpa [#allocation9], 1
    %s1643 = scalar_lea.sflag [#allocation9], 1
    %1644 = vsyncpa %s1643, 1
    %1645 = vsyncpa [#allocation4], 1
    %s1646 = scalar_lea.sflag [#allocation4], 1
    %1647 = vsyncpa %s1646, 1

</llo_original>
